<compile_context>
chip_gen: v7x
topology: tpu7x:2x2x1
jax: 0.10.0
libtpu: 0.0.40
codegen_flags: <defaults>
</compile_context>

<pallas_src>
import jax
import jax.numpy as jnp
from jax.experimental import pallas as pl
from jax.experimental.pallas import tpu as pltpu


# ---------------------------------------------------------------------------
# Pallas kernel: whole MLP forward, fused
# ---------------------------------------------------------------------------

def _mlp_kernel(x_ref, w1_ref, b1_ref, w2_ref, b2_ref, w3_ref, b3_ref, o_ref):
    # x_ref:  (TN, D)        bf16 input rows for this batch tile
    # w*_ref: (Din, Dout)    bf16 pre-transposed Linear weights (w3 lane-padded)
    # b*_ref: (1, Dout)      f32 biases (b3 lane-padded)
    # o_ref:  (TN, NC_PAD)   f32 output (lane-dense, 128-wide)
    h = jnp.dot(x_ref[...], w1_ref[...], preferred_element_type=jnp.float32)
    h = jnp.maximum(h + b1_ref[...], 0.0)                       # fc_1 + ReLU
    h = jnp.dot(h.astype(jnp.bfloat16), w2_ref[...],
                preferred_element_type=jnp.float32)
    h = jnp.maximum(h + b2_ref[...], 0.0)                       # fc_2 + ReLU
    o_ref[...] = jnp.dot(h.astype(jnp.bfloat16), w3_ref[...],
                         preferred_element_type=jnp.float32) + b3_ref[...]  # fc_3


# ---------------------------------------------------------------------------
# Wrapper
# ---------------------------------------------------------------------------

def _round_up(a, b):
    return ((a + b - 1) // b) * b


_MAX_TILE = 1024  # rows per grid step; bf16 x tile = 1024*3072*2B = 6 MiB


def mlp_forward(params, x, num_classes):
    # x: (N, C, H, W); x.view(N, -1) == reshape(N, -1).
    n = x.shape[0]
    xf = x.reshape(n, -1).astype(jnp.bfloat16)   # halve the dominant HBM stream

    w1, b1 = params['w1'], params['b1']          # (D, 128) bf16, (1, 128) f32
    w2, b2 = params['w2'], params['b2']          # (128, 128) bf16, (1, 128) f32
    w3, b3 = params['w3'], params['b3']          # (128, NCP) bf16, (1, NCP) f32

    d = w1.shape[0]
    hidden = w1.shape[1]
    nc_pad = w3.shape[1]
    assert xf.shape[1] == d, (xf.shape, d)

    # Tile selection: large tiles for bandwidth, but >= 2 grid steps once the
    # batch is nontrivial so both v7x TensorCores participate.
    if n >= 16:
        tn = min(_MAX_TILE, _round_up(pl.cdiv(n, 2), 8))
    else:
        tn = n  # block dim == full array dim, no (8,128) constraint issue
    grid = (pl.cdiv(n, tn),)

    # Invariant operands (same block every grid step) -> single buffer.
    const = dict(pipeline_mode=pl.Buffered(1))

    flops = 2 * n * (d * hidden + hidden * hidden + hidden * nc_pad)
    bytes_accessed = (
        n * d * 2                                             # x (bf16)
        + (d * hidden + hidden * hidden + hidden * nc_pad) * 2  # weights (bf16)
        + (2 * hidden + nc_pad) * 4                            # biases (f32)
        + n * nc_pad * 4                                       # output (f32)
    )

    out = pl.pallas_call(
        _mlp_kernel,
        out_shape=jax.ShapeDtypeStruct((n, nc_pad), jnp.float32),
        grid=grid,
        in_specs=[
            pl.BlockSpec((tn, d), lambda i: (i, 0)),
            pl.BlockSpec((d, hidden), lambda i: (0, 0), **const),
            pl.BlockSpec((1, hidden), lambda i: (0, 0), **const),
            pl.BlockSpec((hidden, hidden), lambda i: (0, 0), **const),
            pl.BlockSpec((1, hidden), lambda i: (0, 0), **const),
            pl.BlockSpec((hidden, nc_pad), lambda i: (0, 0), **const),
            pl.BlockSpec((1, nc_pad), lambda i: (0, 0), **const),
        ],
        out_specs=pl.BlockSpec((tn, nc_pad), lambda i: (i, 0)),
        compiler_params=pltpu.CompilerParams(
            dimension_semantics=("parallel",),       # batch tiles shard on v7x TCs
            vmem_limit_bytes=40 * 1024 * 1024,       # room for 1024-row bf16 tiles
        ),
        cost_estimate=pl.CostEstimate(
            flops=flops, transcendentals=0, bytes_accessed=bytes_accessed),
    )(xf, w1, b1, w2, b2, w3, b3)

    return out[:, :num_classes] if nc_pad != num_classes else out


# ---------------------------------------------------------------------------
# Parameter init (deterministic) — weights already laid out for the kernel
# ---------------------------------------------------------------------------

def init_params(key, channel, num_classes):
    in_dim = 28 * 28 * 1 if channel == 1 else 32 * 32 * 3
    nc_pad = max(128, _round_up(num_classes, 128))   # lane-dense final output
    layer_dims = [
        ((in_dim, 128), ('w1', 'b1'), 128),
        ((128, 128), ('w2', 'b2'), 128),
        ((128, num_classes), ('w3', 'b3'), nc_pad),
    ]
    params = {}
    for (din, dout), (wn, bn), dpad in layer_dims:
        key, kw, kb = jax.random.split(key, 3)
        bound = 1.0 / jnp.sqrt(din)
        # PyTorch Linear default init, stored pre-transposed as (in, out);
        # final layer is zero-padded on the output dim to 128 lanes.
        w = jax.random.uniform(kw, (din, dout), jnp.float32, -bound, bound)
        b = jax.random.uniform(kb, (1, dout), jnp.float32, -bound, bound)
        if dpad != dout:
            w = jnp.pad(w, ((0, 0), (0, dpad - dout)))
            b = jnp.pad(b, ((0, 0), (0, dpad - dout)))
        params[wn] = w.astype(jnp.bfloat16)   # bf16 MXU operands
        params[bn] = b                        # biases stay f32 (added post-matmul)
    return params


def _mlp_reference(params, x, num_classes):
    # Pure-JAX f32 reference (same stored weights, f32 math throughout).
    n = x.shape[0]
    h = x.reshape(n, -1).astype(jnp.float32)
    h = jnp.maximum(h @ params['w1'].astype(jnp.float32) + params['b1'], 0.0)
    h = jnp.maximum(h @ params['w2'].astype(jnp.float32) + params['b2'], 0.0)
    out = h @ params['w3'].astype(jnp.float32) + params['b3']
    return out[:, :num_classes]


if __name__ == "__main__":
    channel = 3
    num_classes = 10

    key = jax.random.PRNGKey(0)
    kx, kp = jax.random.split(key)
    # channel == 3  =>  fc_1 expects 32*32*3 = 3072 features.
    x = jax.random.normal(kx, (2, channel, 32, 32), jnp.float32)
    params = init_params(kp, channel, num_classes)

    out = mlp_forward(params, x, num_classes)
    out = jax.block_until_ready(out)

    assert out.shape == (2, num_classes), out.shape
    assert bool(jnp.all(jnp.isfinite(out)))

    ref = _mlp_reference(params, x, num_classes)
    # bf16 MXU operands (f32 accumulate) -> ~1e-2-level deviation from f32 ref.
    assert bool(jnp.allclose(out, ref, atol=5e-2, rtol=5e-2)), (
        jnp.max(jnp.abs(out - ref)))

    print("KERNEL_OK")
</pallas_src>

<mosaic_0001>
module attributes {stable_mosaic.version = 11 : i64} {
  func.func @_mlp_kernel(%arg0: i32, %arg1: memref<2x3072xbf16, #tpu.memory_space<vmem>>, %arg2: memref<3072x128xbf16, #tpu.memory_space<vmem>>, %arg3: memref<1x128xf32, #tpu.memory_space<vmem>>, %arg4: memref<128x128xbf16, #tpu.memory_space<vmem>>, %arg5: memref<1x128xf32, #tpu.memory_space<vmem>>, %arg6: memref<128x128xbf16, #tpu.memory_space<vmem>>, %arg7: memref<1x128xf32, #tpu.memory_space<vmem>>, %arg8: memref<2x128xf32, #tpu.memory_space<vmem>>) attributes {dimension_semantics = [#tpu.dimension_semantics<parallel>], iteration_bounds = array<i64: 1>, scalar_prefetch = 0 : i64, scratch_operands = 0 : i64, tpu.core_type = #tpu.core_type<tc>, window_params = [{transform_indices = @transform_0, window_bounds = array<i64: 2, 3072>}, {pipeline_mode = #tpu.pipeline_mode<synchronous>, transform_indices = @transform_1, window_bounds = array<i64: 3072, 128>}, {pipeline_mode = #tpu.pipeline_mode<synchronous>, transform_indices = @transform_2, window_bounds = array<i64: 1, 128>}, {pipeline_mode = #tpu.pipeline_mode<synchronous>, transform_indices = @transform_3, window_bounds = array<i64: 128, 128>}, {pipeline_mode = #tpu.pipeline_mode<synchronous>, transform_indices = @transform_4, window_bounds = array<i64: 1, 128>}, {pipeline_mode = #tpu.pipeline_mode<synchronous>, transform_indices = @transform_5, window_bounds = array<i64: 128, 128>}, {pipeline_mode = #tpu.pipeline_mode<synchronous>, transform_indices = @transform_6, window_bounds = array<i64: 1, 128>}, {transform_indices = @transform_7, window_bounds = array<i64: 2, 128>}]} {
    %c0 = arith.constant 0 : index
    %c0_0 = arith.constant 0 : index
    %0 = vector.load %arg1[%c0, %c0_0] : memref<2x3072xbf16, #tpu.memory_space<vmem>>, vector<2x3072xbf16>
    %c0_1 = arith.constant 0 : index
    %c0_2 = arith.constant 0 : index
    %1 = vector.load %arg2[%c0_1, %c0_2] : memref<3072x128xbf16, #tpu.memory_space<vmem>>, vector<3072x128xbf16>
    %cst = arith.constant dense<0.000000e+00> : vector<2x128xf32>
    %2 = tpu.matmul %0, %1, %cst {dimension_numbers = #tpu.dot_dimension_numbers<[1], [0], [0], [1], [0, 0, 1, 1], [], []>} : vector<2x3072xbf16>, vector<3072x128xbf16>, vector<2x128xf32> -> vector<2x128xf32>
    %c0_3 = arith.constant 0 : index
    %c0_4 = arith.constant 0 : index
    %3 = vector.load %arg3[%c0_3, %c0_4] : memref<1x128xf32, #tpu.memory_space<vmem>>, vector<1x128xf32>
    %4 = vector.broadcast %3 : vector<1x128xf32> to vector<2x128xf32>
    %5 = arith.addf %2, %4 : vector<2x128xf32>
    %cst_5 = arith.constant 0.000000e+00 : f32
    %6 = vector.broadcast %cst_5 : f32 to vector<2x128xf32>
    %7 = arith.maximumf %5, %6 : vector<2x128xf32>
    %8 = arith.truncf %7 : vector<2x128xf32> to vector<2x128xbf16>
    %c0_6 = arith.constant 0 : index
    %c0_7 = arith.constant 0 : index
    %9 = vector.load %arg4[%c0_6, %c0_7] : memref<128x128xbf16, #tpu.memory_space<vmem>>, vector<128x128xbf16>
    %cst_8 = arith.constant dense<0.000000e+00> : vector<2x128xf32>
    %10 = tpu.matmul %8, %9, %cst_8 {dimension_numbers = #tpu.dot_dimension_numbers<[1], [0], [0], [1], [0, 0, 1, 1], [], []>} : vector<2x128xbf16>, vector<128x128xbf16>, vector<2x128xf32> -> vector<2x128xf32>
    %c0_9 = arith.constant 0 : index
    %c0_10 = arith.constant 0 : index
    %11 = vector.load %arg5[%c0_9, %c0_10] : memref<1x128xf32, #tpu.memory_space<vmem>>, vector<1x128xf32>
    %12 = vector.broadcast %11 : vector<1x128xf32> to vector<2x128xf32>
    %13 = arith.addf %10, %12 : vector<2x128xf32>
    %cst_11 = arith.constant 0.000000e+00 : f32
    %14 = vector.broadcast %cst_11 : f32 to vector<2x128xf32>
    %15 = arith.maximumf %13, %14 : vector<2x128xf32>
    %16 = arith.truncf %15 : vector<2x128xf32> to vector<2x128xbf16>
    %c0_12 = arith.constant 0 : index
    %c0_13 = arith.constant 0 : index
    %17 = vector.load %arg6[%c0_12, %c0_13] : memref<128x128xbf16, #tpu.memory_space<vmem>>, vector<128x128xbf16>
    %cst_14 = arith.constant dense<0.000000e+00> : vector<2x128xf32>
    %18 = tpu.matmul %16, %17, %cst_14 {dimension_numbers = #tpu.dot_dimension_numbers<[1], [0], [0], [1], [0, 0, 1, 1], [], []>} : vector<2x128xbf16>, vector<128x128xbf16>, vector<2x128xf32> -> vector<2x128xf32>
    %c0_15 = arith.constant 0 : index
    %c0_16 = arith.constant 0 : index
    %19 = vector.load %arg7[%c0_15, %c0_16] : memref<1x128xf32, #tpu.memory_space<vmem>>, vector<1x128xf32>
    %20 = vector.broadcast %19 : vector<1x128xf32> to vector<2x128xf32>
    %21 = arith.addf %18, %20 : vector<2x128xf32>
    %c0_17 = arith.constant 0 : index
    %c0_18 = arith.constant 0 : index
    %22 = vector.load %arg8[%c0_17, %c0_18] : memref<2x128xf32, #tpu.memory_space<vmem>>, vector<2x128xf32>
    tpu.vector_store %arg8[%c0_17, %c0_18], %21 {strides = array<i32>} : memref<2x128xf32, #tpu.memory_space<vmem>>, vector<2x128xf32>,
    return
  }
  func.func @transform_0(%arg0: i32) -> (i32, i32) {
    %c0_i32 = arith.constant 0 : i32
    %c0_i32_0 = arith.constant 0 : i32
    return %arg0, %c0_i32 : i32, i32
  }
  func.func @transform_1(%arg0: i32) -> (i32, i32) {
    %c0_i32 = arith.constant 0 : i32
    %c0_i32_0 = arith.constant 0 : i32
    %c0_i32_1 = arith.constant 0 : i32
    return %c0_i32, %c0_i32_0 : i32, i32
  }
  func.func @transform_2(%arg0: i32) -> (i32, i32) {
    %c0_i32 = arith.constant 0 : i32
    %c0_i32_0 = arith.constant 0 : i32
    %c0_i32_1 = arith.constant 0 : i32
    return %c0_i32, %c0_i32_0 : i32, i32
  }
  func.func @transform_3(%arg0: i32) -> (i32, i32) {
    %c0_i32 = arith.constant 0 : i32
    %c0_i32_0 = arith.constant 0 : i32
    %c0_i32_1 = arith.constant 0 : i32
    return %c0_i32, %c0_i32_0 : i32, i32
  }
  func.func @transform_4(%arg0: i32) -> (i32, i32) {
    %c0_i32 = arith.constant 0 : i32
    %c0_i32_0 = arith.constant 0 : i32
    %c0_i32_1 = arith.constant 0 : i32
    return %c0_i32, %c0_i32_0 : i32, i32
  }
  func.func @transform_5(%arg0: i32) -> (i32, i32) {
    %c0_i32 = arith.constant 0 : i32
    %c0_i32_0 = arith.constant 0 : i32
    %c0_i32_1 = arith.constant 0 : i32
    return %c0_i32, %c0_i32_0 : i32, i32
  }
  func.func @transform_6(%arg0: i32) -> (i32, i32) {
    %c0_i32 = arith.constant 0 : i32
    %c0_i32_0 = arith.constant 0 : i32
    %c0_i32_1 = arith.constant 0 : i32
    return %c0_i32, %c0_i32_0 : i32, i32
  }
  func.func @transform_7(%arg0: i32) -> (i32, i32) {
    %c0_i32 = arith.constant 0 : i32
    %c0_i32_0 = arith.constant 0 : i32
    return %arg0, %c0_i32 : i32, i32
  }
}

</mosaic_0001>

<llo_original>
// kernel: tpu_custom_call.1
$region0: #{tpu_custom_call.1}
  #allocation0 [shape = 'u32[]', space=smem, size = 0x4, offset = 0x4, fixed_abs, tag = 'smem constant byte address 0x4 - core index']
  #allocation1 [shape = 'u32[144,128]{1,0:T(1,128)}', space=vmem, size = 0x12000, scoped, tag = 'internal scratch']
  %s0 = inlined_call_operand.hbm [shape: bf16[2,3072], index: 0, kind: input, shape index: {}]
  %s1 = inlined_call_operand.hbm [shape: bf16[3072,128], index: 1, kind: input, shape index: {}]
  %s2 = inlined_call_operand.vmem [shape: f32[1,128], index: 2, kind: input, shape index: {}]
  %s3 = inlined_call_operand.hbm [shape: bf16[128,128], index: 3, kind: input, shape index: {}]
  %s4 = inlined_call_operand.vmem [shape: f32[1,128], index: 4, kind: input, shape index: {}]
  %s5 = inlined_call_operand.hbm [shape: bf16[128,128], index: 5, kind: input, shape index: {}]
  %s6 = inlined_call_operand.vmem [shape: f32[1,128], index: 6, kind: input, shape index: {}]
  %s7 = inlined_call_operand.hbm [shape: f32[2,128], index: 7, kind: output, shape index: {}]
  %s8 = sld [smem:[#allocation0]]
  $region54: #{tpu_custom_call.1} parent=0
    _
  %s10 = ssub.s32 1, %s8
  %s11 = scalar_select 0, %s10, %s8
  $region1: #{tpu_custom_call.1} parent=0
    #allocation2 [shape = 'u8[12288]{0}', space=vmem, size = 0x3000, scoped, tag = 'input window, operand 0, single buffered']
    #allocation3 [shape = 's32[1]{0}', space=sflag, size = 0x4, scoped, tag = 'scoped memory for tpu_custom_call.1']
    #allocation4 [shape = 's32[1]{0}', space=sflag, size = 0x4, scoped, tag = 'scoped memory for tpu_custom_call.1']
    #allocation5 [shape = 'u8[786432]{0}', space=vmem, size = 0xc0000, scoped, tag = 'input window, operand 1, single buffered']
    #allocation6 [shape = 's32[1]{0}', space=sflag, size = 0x4, scoped, tag = 'scoped memory for tpu_custom_call.1']
    #allocation7 [shape = 'u8[32768]{0}', space=vmem, size = 0x8000, scoped, tag = 'input window, operand 3, single buffered']
    #allocation8 [shape = 'u8[32768]{0}', space=vmem, size = 0x8000, scoped, tag = 'input window, operand 5, single buffered']
    #allocation9 [shape = 's32[1]{0}', space=sflag, size = 0x4, scoped, tag = 'scoped memory for tpu_custom_call.1']
    #allocation10 [shape = 'u8[1024]{0}', space=vmem, size = 0x400, scoped, tag = 'output window, operand 0, single buffered']
    %12 = vsyncpa [#allocation3], 0
    %13 = vsyncpa [#allocation6], 0
    %14 = vsyncpa [#allocation9], 0
    %15 = vsyncpa [#allocation4], 0
    // Predicated region
    $region2: #{tpu_custom_call.1} parent=1 // pred_check
      _
    $region3: #{tpu_custom_call.1} parent=1 // pred_check_branch
      %17 = sbr.rel (0) target = $region5
    $region4: #{tpu_custom_call.1} parent=1 // pred_region
      %s19 = ssub.s32 384, 384
      %20 = vsyncadd [#allocation3], %s19
      %s22 = sshll.u32 [#allocation2], 4
      %s23 = int_to_ptr.vmem [resolvable:$true] %s22
      %25 = dma.hbm_to_vmem [thread:$0]  %s0, 384, %s23, [#allocation3]
    $region5: #{tpu_custom_call.1} parent=1 // pred_fallthru
      _
    // Predicated region
    $region6: #{tpu_custom_call.1} parent=1 // pred_check
      _
    $region7: #{tpu_custom_call.1} parent=1 // pred_check_branch
      %27 = sbr.rel (0) target = $region9
    $region8: #{tpu_custom_call.1} parent=1 // pred_region
      %s29 = ssub.s32 24576, 24576
      %30 = vsyncadd [#allocation6], %s29
      %s31 = sshll.u32 [#allocation5], 4
      %s32 = int_to_ptr.vmem [resolvable:$true] %s31
      %37 = dma.hbm_to_vmem [thread:$0]  %s1, 24576, %s32, [#allocation6], 64, 64, 4
    $region9: #{tpu_custom_call.1} parent=1 // pred_fallthru
      _
    // Predicated region
    $region10: #{tpu_custom_call.1} parent=1 // pred_check
      _
    $region11: #{tpu_custom_call.1} parent=1 // pred_check_branch
      %39 = sbr.rel (0) target = $region13
    $region12: #{tpu_custom_call.1} parent=1 // pred_region
      _
    $region13: #{tpu_custom_call.1} parent=1 // pred_fallthru
      _
    // Predicated region
    $region14: #{tpu_custom_call.1} parent=1 // pred_check
      _
    $region15: #{tpu_custom_call.1} parent=1 // pred_check_branch
      %41 = sbr.rel (0) target = $region17
    $region16: #{tpu_custom_call.1} parent=1 // pred_region
      %s43 = ssub.s32 1024, 1024
      %44 = vsyncadd [#allocation6], %s43
      %s45 = sshll.u32 [#allocation7], 4
      %s46 = int_to_ptr.vmem [resolvable:$true] %s45
      %51 = dma.hbm_to_vmem [thread:$0]  %s3, 1024, %s46, [#allocation6], 64, 64, 4
    $region17: #{tpu_custom_call.1} parent=1 // pred_fallthru
      _
    // Predicated region
    $region18: #{tpu_custom_call.1} parent=1 // pred_check
      _
    $region19: #{tpu_custom_call.1} parent=1 // pred_check_branch
      %53 = sbr.rel (0) target = $region21
    $region20: #{tpu_custom_call.1} parent=1 // pred_region
      _
    $region21: #{tpu_custom_call.1} parent=1 // pred_fallthru
      _
    // Predicated region
    $region22: #{tpu_custom_call.1} parent=1 // pred_check
      _
    $region23: #{tpu_custom_call.1} parent=1 // pred_check_branch
      %55 = sbr.rel (0) target = $region25
    $region24: #{tpu_custom_call.1} parent=1 // pred_region
      %s57 = ssub.s32 1024, 1024
      %58 = vsyncadd [#allocation9], %s57
      %s59 = sshll.u32 [#allocation8], 4
      %s60 = int_to_ptr.vmem [resolvable:$true] %s59
      %65 = dma.hbm_to_vmem [thread:$0]  %s5, 1024, %s60, [#allocation9], 64, 64, 4
    $region25: #{tpu_custom_call.1} parent=1 // pred_fallthru
      _
    // Predicated region
    $region26: #{tpu_custom_call.1} parent=1 // pred_check
      _
    $region27: #{tpu_custom_call.1} parent=1 // pred_check_branch
      %67 = sbr.rel (0) target = $region29
    $region28: #{tpu_custom_call.1} parent=1 // pred_region
      _
    $region29: #{tpu_custom_call.1} parent=1 // pred_fallthru
      _
    // Predicated region
    $region30: #{tpu_custom_call.1} parent=1 // pred_check
      _
    $region31: #{tpu_custom_call.1} parent=1 // pred_check_branch
      %69 = sbr.rel (0) target = $region33
    $region32: #{tpu_custom_call.1} parent=1 // pred_region
      %70 = dma.done [#allocation3], 384
    $region33: #{tpu_custom_call.1} parent=1 // pred_fallthru
      _
    // Predicated region
    $region34: #{tpu_custom_call.1} parent=1 // pred_check
      _
    $region35: #{tpu_custom_call.1} parent=1 // pred_check_branch
      %72 = sbr.rel (0) target = $region37
    $region36: #{tpu_custom_call.1} parent=1 // pred_region
      %73 = dma.done [#allocation6], 24576
    $region37: #{tpu_custom_call.1} parent=1 // pred_fallthru
      _
    // Predicated region
    $region38: #{tpu_custom_call.1} parent=1 // pred_check
      _
    $region39: #{tpu_custom_call.1} parent=1 // pred_check_branch
      %75 = sbr.rel (0) target = $region41
    $region40: #{tpu_custom_call.1} parent=1 // pred_region
      %76 = dma.done [#allocation6], 1024
    $region41: #{tpu_custom_call.1} parent=1 // pred_fallthru
      _
    // Predicated region
    $region42: #{tpu_custom_call.1} parent=1 // pred_check
      _
    $region43: #{tpu_custom_call.1} parent=1 // pred_check_branch
      %78 = sbr.rel (0) target = $region45
    $region44: #{tpu_custom_call.1} parent=1 // pred_region
      %79 = dma.done [#allocation9], 1024
    $region45: #{tpu_custom_call.1} parent=1 // pred_fallthru
      _
    %v81 = vld [vmem:[#allocation2] sm:$0xff]
    %v82 = vld [vmem:[#allocation2 + $0x8] sm:$0xff]
    %v83 = vld [vmem:[#allocation2 + $0x10] sm:$0xff]
    %v84 = vld [vmem:[#allocation5] sm:$0xf]
    %v85 = vld [vmem:[#allocation5 + $0x4] sm:$0xf]
    %v86 = vld [vmem:[#allocation5 + $0x8] sm:$0xf]
    %v87 = vld [vmem:[#allocation5 + $0xc] sm:$0xf]
    %v88 = vld [vmem:[#allocation5 + $0x10] sm:$0xf]
    %v89 = vld [vmem:[#allocation5 + $0x14] sm:$0xf]
    %v90 = vld [vmem:[#allocation5 + $0x18] sm:$0xf]
    %v91 = vld [vmem:[#allocation5 + $0x1c] sm:$0xf]
    %v92 = vld [vmem:[#allocation5 + $0x20] sm:$0xf]
    %v93 = vld [vmem:[#allocation5 + $0x24] sm:$0xf]
    %v94 = vld [vmem:[#allocation5 + $0x28] sm:$0xf]
    %v95 = vld [vmem:[#allocation5 + $0x2c] sm:$0xf]
    %v96 = vld [vmem:[#allocation5 + $0x30] sm:$0xf]
    %v97 = vld [vmem:[#allocation5 + $0x34] sm:$0xf]
    %v98 = vld [vmem:[#allocation5 + $0x38] sm:$0xf]
    %v99 = vld [vmem:[#allocation5 + $0x3c] sm:$0xf]
    %v100 = vld [vmem:[#allocation5 + $0x40] sm:$0xf]
    %v101 = vld [vmem:[#allocation5 + $0x44] sm:$0xf]
    %v102 = vld [vmem:[#allocation5 + $0x48] sm:$0xf]
    %v103 = vld [vmem:[#allocation5 + $0x4c] sm:$0xf]
    %v104 = vld [vmem:[#allocation5 + $0x50] sm:$0xf]
    %v105 = vld [vmem:[#allocation5 + $0x54] sm:$0xf]
    %v106 = vld [vmem:[#allocation5 + $0x58] sm:$0xf]
    %v107 = vld [vmem:[#allocation5 + $0x5c] sm:$0xf]
    %v108 = vld [vmem:[#allocation5 + $0x60] sm:$0xf]
    %v109 = vld [vmem:[#allocation5 + $0x64] sm:$0xf]
    %v110 = vld [vmem:[#allocation5 + $0x68] sm:$0xf]
    %v111 = vld [vmem:[#allocation5 + $0x6c] sm:$0xf]
    %v112 = vld [vmem:[#allocation5 + $0x70] sm:$0xf]
    %v113 = vld [vmem:[#allocation5 + $0x74] sm:$0xf]
    %v114 = vld [vmem:[#allocation5 + $0x78] sm:$0xf]
    %v115 = vld [vmem:[#allocation5 + $0x7c] sm:$0xf]
    %v116 = vld [vmem:[#allocation5 + $0x80] sm:$0xf]
    %v117 = vld [vmem:[#allocation5 + $0x84] sm:$0xf]
    %v118 = vld [vmem:[#allocation5 + $0x88] sm:$0xf]
    %v119 = vld [vmem:[#allocation5 + $0x8c] sm:$0xf]
    %v120 = vld [vmem:[#allocation5 + $0x90] sm:$0xf]
    %v121 = vld [vmem:[#allocation5 + $0x94] sm:$0xf]
    %v122 = vld [vmem:[#allocation5 + $0x98] sm:$0xf]
    %v123 = vld [vmem:[#allocation5 + $0x9c] sm:$0xf]
    %v124 = vld [vmem:[#allocation5 + $0xa0] sm:$0xf]
    %v125 = vld [vmem:[#allocation5 + $0xa4] sm:$0xf]
    %v126 = vld [vmem:[#allocation5 + $0xa8] sm:$0xf]
    %v127 = vld [vmem:[#allocation5 + $0xac] sm:$0xf]
    %v128 = vld [vmem:[#allocation5 + $0xb0] sm:$0xf]
    %v129 = vld [vmem:[#allocation5 + $0xb4] sm:$0xf]
    %v130 = vld [vmem:[#allocation5 + $0xb8] sm:$0xf]
    %v131 = vld [vmem:[#allocation5 + $0xbc] sm:$0xf]
    %v132 = vld [vmem:[#allocation5 + $0xc0] sm:$0xf]
    %v133 = vld [vmem:[#allocation5 + $0xc4] sm:$0xf]
    %v134 = vld [vmem:[#allocation5 + $0xc8] sm:$0xf]
    %v135 = vld [vmem:[#allocation5 + $0xcc] sm:$0xf]
    %v136 = vld [vmem:[#allocation5 + $0xd0] sm:$0xf]
    %v137 = vld [vmem:[#allocation5 + $0xd4] sm:$0xf]
    %v138 = vld [vmem:[#allocation5 + $0xd8] sm:$0xf]
    %v139 = vld [vmem:[#allocation5 + $0xdc] sm:$0xf]
    %v140 = vld [vmem:[#allocation5 + $0xe0] sm:$0xf]
    %v141 = vld [vmem:[#allocation5 + $0xe4] sm:$0xf]
    %v142 = vld [vmem:[#allocation5 + $0xe8] sm:$0xf]
    %v143 = vld [vmem:[#allocation5 + $0xec] sm:$0xf]
    %v144 = vld [vmem:[#allocation5 + $0xf0] sm:$0xf]
    %v145 = vld [vmem:[#allocation5 + $0xf4] sm:$0xf]
    %v146 = vld [vmem:[#allocation5 + $0xf8] sm:$0xf]
    %v147 = vld [vmem:[#allocation5 + $0xfc] sm:$0xf]
    %v148 = vld [vmem:[#allocation5 + $0x100] sm:$0xf]
    %v149 = vld [vmem:[#allocation5 + $0x104] sm:$0xf]
    %v150 = vld [vmem:[#allocation5 + $0x108] sm:$0xf]
    %v151 = vld [vmem:[#allocation5 + $0x10c] sm:$0xf]
    %v152 = vld [vmem:[#allocation5 + $0x110] sm:$0xf]
    %v153 = vld [vmem:[#allocation5 + $0x114] sm:$0xf]
    %v154 = vld [vmem:[#allocation5 + $0x118] sm:$0xf]
    %v155 = vld [vmem:[#allocation5 + $0x11c] sm:$0xf]
    %v156 = vld [vmem:[#allocation5 + $0x120] sm:$0xf]
    %v157 = vld [vmem:[#allocation5 + $0x124] sm:$0xf]
    %v158 = vld [vmem:[#allocation5 + $0x128] sm:$0xf]
    %v159 = vld [vmem:[#allocation5 + $0x12c] sm:$0xf]
    %v160 = vld [vmem:[#allocation5 + $0x130] sm:$0xf]
    %v161 = vld [vmem:[#allocation5 + $0x134] sm:$0xf]
    %v162 = vld [vmem:[#allocation5 + $0x138] sm:$0xf]
    %v163 = vld [vmem:[#allocation5 + $0x13c] sm:$0xf]
    %v164 = vld [vmem:[#allocation5 + $0x140] sm:$0xf]
    %v165 = vld [vmem:[#allocation5 + $0x144] sm:$0xf]
    %v166 = vld [vmem:[#allocation5 + $0x148] sm:$0xf]
    %v167 = vld [vmem:[#allocation5 + $0x14c] sm:$0xf]
    %v168 = vld [vmem:[#allocation5 + $0x150] sm:$0xf]
    %v169 = vld [vmem:[#allocation5 + $0x154] sm:$0xf]
    %v170 = vld [vmem:[#allocation5 + $0x158] sm:$0xf]
    %v171 = vld [vmem:[#allocation5 + $0x15c] sm:$0xf]
    %v172 = vld [vmem:[#allocation5 + $0x160] sm:$0xf]
    %v173 = vld [vmem:[#allocation5 + $0x164] sm:$0xf]
    %v174 = vld [vmem:[#allocation5 + $0x168] sm:$0xf]
    %v175 = vld [vmem:[#allocation5 + $0x16c] sm:$0xf]
    %v176 = vld [vmem:[#allocation5 + $0x170] sm:$0xf]
    %v177 = vld [vmem:[#allocation5 + $0x174] sm:$0xf]
    %v178 = vld [vmem:[#allocation5 + $0x178] sm:$0xf]
    %v179 = vld [vmem:[#allocation5 + $0x17c] sm:$0xf]
    %v180 = vld [vmem:[#allocation5 + $0x180] sm:$0xf]
    %v181 = vld [vmem:[#allocation5 + $0x184] sm:$0xf]
    %v182 = vld [vmem:[#allocation5 + $0x188] sm:$0xf]
    %v183 = vld [vmem:[#allocation5 + $0x18c] sm:$0xf]
    %v184 = vld [vmem:[#allocation5 + $0x190] sm:$0xf]
    %v185 = vld [vmem:[#allocation5 + $0x194] sm:$0xf]
    %v186 = vld [vmem:[#allocation5 + $0x198] sm:$0xf]
    %v187 = vld [vmem:[#allocation5 + $0x19c] sm:$0xf]
    %v188 = vld [vmem:[#allocation5 + $0x1a0] sm:$0xf]
    %v189 = vld [vmem:[#allocation5 + $0x1a4] sm:$0xf]
    %v190 = vld [vmem:[#allocation5 + $0x1a8] sm:$0xf]
    %v191 = vld [vmem:[#allocation5 + $0x1ac] sm:$0xf]
    %v192 = vld [vmem:[#allocation5 + $0x1b0] sm:$0xf]
    %v193 = vld [vmem:[#allocation5 + $0x1b4] sm:$0xf]
    %v194 = vld [vmem:[#allocation5 + $0x1b8] sm:$0xf]
    %v195 = vld [vmem:[#allocation5 + $0x1bc] sm:$0xf]
    %v196 = vld [vmem:[#allocation5 + $0x1c0] sm:$0xf]
    %v197 = vld [vmem:[#allocation5 + $0x1c4] sm:$0xf]
    %v198 = vld [vmem:[#allocation5 + $0x1c8] sm:$0xf]
    %v199 = vld [vmem:[#allocation5 + $0x1cc] sm:$0xf]
    %v200 = vld [vmem:[#allocation5 + $0x1d0] sm:$0xf]
    %v201 = vld [vmem:[#allocation5 + $0x1d4] sm:$0xf]
    %v202 = vld [vmem:[#allocation5 + $0x1d8] sm:$0xf]
    %v203 = vld [vmem:[#allocation5 + $0x1dc] sm:$0xf]
    %v204 = vld [vmem:[#allocation5 + $0x1e0] sm:$0xf]
    %v205 = vld [vmem:[#allocation5 + $0x1e4] sm:$0xf]
    %v206 = vld [vmem:[#allocation5 + $0x1e8] sm:$0xf]
    %v207 = vld [vmem:[#allocation5 + $0x1ec] sm:$0xf]
    %v208 = vld [vmem:[#allocation5 + $0x1f0] sm:$0xf]
    %v209 = vld [vmem:[#allocation5 + $0x1f4] sm:$0xf]
    %v210 = vld [vmem:[#allocation5 + $0x1f8] sm:$0xf]
    %v211 = vld [vmem:[#allocation5 + $0x1fc] sm:$0xf]
    %v212 = vld [vmem:[#allocation5 + $0x200] sm:$0xf]
    %v213 = vld [vmem:[#allocation5 + $0x204] sm:$0xf]
    %v214 = vld [vmem:[#allocation5 + $0x208] sm:$0xf]
    %v215 = vld [vmem:[#allocation5 + $0x20c] sm:$0xf]
    %v216 = vld [vmem:[#allocation5 + $0x210] sm:$0xf]
    %v217 = vld [vmem:[#allocation5 + $0x214] sm:$0xf]
    %v218 = vld [vmem:[#allocation5 + $0x218] sm:$0xf]
    %v219 = vld [vmem:[#allocation5 + $0x21c] sm:$0xf]
    %v220 = vld [vmem:[#allocation5 + $0x220] sm:$0xf]
    %v221 = vld [vmem:[#allocation5 + $0x224] sm:$0xf]
    %v222 = vld [vmem:[#allocation5 + $0x228] sm:$0xf]
    %v223 = vld [vmem:[#allocation5 + $0x22c] sm:$0xf]
    %v224 = vld [vmem:[#allocation5 + $0x230] sm:$0xf]
    %v225 = vld [vmem:[#allocation5 + $0x234] sm:$0xf]
    %v226 = vld [vmem:[#allocation5 + $0x238] sm:$0xf]
    %v227 = vld [vmem:[#allocation5 + $0x23c] sm:$0xf]
    %v228 = vld [vmem:[#allocation5 + $0x240] sm:$0xf]
    %v229 = vld [vmem:[#allocation5 + $0x244] sm:$0xf]
    %v230 = vld [vmem:[#allocation5 + $0x248] sm:$0xf]
    %v231 = vld [vmem:[#allocation5 + $0x24c] sm:$0xf]
    %v232 = vld [vmem:[#allocation5 + $0x250] sm:$0xf]
    %v233 = vld [vmem:[#allocation5 + $0x254] sm:$0xf]
    %v234 = vld [vmem:[#allocation5 + $0x258] sm:$0xf]
    %v235 = vld [vmem:[#allocation5 + $0x25c] sm:$0xf]
    %v236 = vld [vmem:[#allocation5 + $0x260] sm:$0xf]
    %v237 = vld [vmem:[#allocation5 + $0x264] sm:$0xf]
    %v238 = vld [vmem:[#allocation5 + $0x268] sm:$0xf]
    %v239 = vld [vmem:[#allocation5 + $0x26c] sm:$0xf]
    %v240 = vld [vmem:[#allocation5 + $0x270] sm:$0xf]
    %v241 = vld [vmem:[#allocation5 + $0x274] sm:$0xf]
    %v242 = vld [vmem:[#allocation5 + $0x278] sm:$0xf]
    %v243 = vld [vmem:[#allocation5 + $0x27c] sm:$0xf]
    %v244 = vld [vmem:[#allocation5 + $0x280] sm:$0xf]
    %v245 = vld [vmem:[#allocation5 + $0x284] sm:$0xf]
    %v246 = vld [vmem:[#allocation5 + $0x288] sm:$0xf]
    %v247 = vld [vmem:[#allocation5 + $0x28c] sm:$0xf]
    %v248 = vld [vmem:[#allocation5 + $0x290] sm:$0xf]
    %v249 = vld [vmem:[#allocation5 + $0x294] sm:$0xf]
    %v250 = vld [vmem:[#allocation5 + $0x298] sm:$0xf]
    %v251 = vld [vmem:[#allocation5 + $0x29c] sm:$0xf]
    %v252 = vld [vmem:[#allocation5 + $0x2a0] sm:$0xf]
    %v253 = vld [vmem:[#allocation5 + $0x2a4] sm:$0xf]
    %v254 = vld [vmem:[#allocation5 + $0x2a8] sm:$0xf]
    %v255 = vld [vmem:[#allocation5 + $0x2ac] sm:$0xf]
    %v256 = vld [vmem:[#allocation5 + $0x2b0] sm:$0xf]
    %v257 = vld [vmem:[#allocation5 + $0x2b4] sm:$0xf]
    %v258 = vld [vmem:[#allocation5 + $0x2b8] sm:$0xf]
    %v259 = vld [vmem:[#allocation5 + $0x2bc] sm:$0xf]
    %v260 = vld [vmem:[#allocation5 + $0x2c0] sm:$0xf]
    %v261 = vld [vmem:[#allocation5 + $0x2c4] sm:$0xf]
    %v262 = vld [vmem:[#allocation5 + $0x2c8] sm:$0xf]
    %v263 = vld [vmem:[#allocation5 + $0x2cc] sm:$0xf]
    %v264 = vld [vmem:[#allocation5 + $0x2d0] sm:$0xf]
    %v265 = vld [vmem:[#allocation5 + $0x2d4] sm:$0xf]
    %v266 = vld [vmem:[#allocation5 + $0x2d8] sm:$0xf]
    %v267 = vld [vmem:[#allocation5 + $0x2dc] sm:$0xf]
    %v268 = vld [vmem:[#allocation5 + $0x2e0] sm:$0xf]
    %v269 = vld [vmem:[#allocation5 + $0x2e4] sm:$0xf]
    %v270 = vld [vmem:[#allocation5 + $0x2e8] sm:$0xf]
    %v271 = vld [vmem:[#allocation5 + $0x2ec] sm:$0xf]
    %v272 = vld [vmem:[#allocation5 + $0x2f0] sm:$0xf]
    %v273 = vld [vmem:[#allocation5 + $0x2f4] sm:$0xf]
    %v274 = vld [vmem:[#allocation5 + $0x2f8] sm:$0xf]
    %v275 = vld [vmem:[#allocation5 + $0x2fc] sm:$0xf]
    %v276 = vld [vmem:[#allocation5 + $0x300] sm:$0xf]
    %v277 = vld [vmem:[#allocation5 + $0x304] sm:$0xf]
    %v278 = vld [vmem:[#allocation5 + $0x308] sm:$0xf]
    %v279 = vld [vmem:[#allocation5 + $0x30c] sm:$0xf]
    %v280 = vld [vmem:[#allocation5 + $0x310] sm:$0xf]
    %v281 = vld [vmem:[#allocation5 + $0x314] sm:$0xf]
    %v282 = vld [vmem:[#allocation5 + $0x318] sm:$0xf]
    %v283 = vld [vmem:[#allocation5 + $0x31c] sm:$0xf]
    %v284 = vld [vmem:[#allocation5 + $0x320] sm:$0xf]
    %v285 = vld [vmem:[#allocation5 + $0x324] sm:$0xf]
    %v286 = vld [vmem:[#allocation5 + $0x328] sm:$0xf]
    %v287 = vld [vmem:[#allocation5 + $0x32c] sm:$0xf]
    %v288 = vld [vmem:[#allocation5 + $0x330] sm:$0xf]
    %v289 = vld [vmem:[#allocation5 + $0x334] sm:$0xf]
    %v290 = vld [vmem:[#allocation5 + $0x338] sm:$0xf]
    %v291 = vld [vmem:[#allocation5 + $0x33c] sm:$0xf]
    %v292 = vld [vmem:[#allocation5 + $0x340] sm:$0xf]
    %v293 = vld [vmem:[#allocation5 + $0x344] sm:$0xf]
    %v294 = vld [vmem:[#allocation5 + $0x348] sm:$0xf]
    %v295 = vld [vmem:[#allocation5 + $0x34c] sm:$0xf]
    %v296 = vld [vmem:[#allocation5 + $0x350] sm:$0xf]
    %v297 = vld [vmem:[#allocation5 + $0x354] sm:$0xf]
    %v298 = vld [vmem:[#allocation5 + $0x358] sm:$0xf]
    %v299 = vld [vmem:[#allocation5 + $0x35c] sm:$0xf]
    %v300 = vld [vmem:[#allocation5 + $0x360] sm:$0xf]
    %v301 = vld [vmem:[#allocation5 + $0x364] sm:$0xf]
    %v302 = vld [vmem:[#allocation5 + $0x368] sm:$0xf]
    %v303 = vld [vmem:[#allocation5 + $0x36c] sm:$0xf]
    %v304 = vld [vmem:[#allocation5 + $0x370] sm:$0xf]
    %v305 = vld [vmem:[#allocation5 + $0x374] sm:$0xf]
    %v306 = vld [vmem:[#allocation5 + $0x378] sm:$0xf]
    %v307 = vld [vmem:[#allocation5 + $0x37c] sm:$0xf]
    %v308 = vld [vmem:[#allocation5 + $0x380] sm:$0xf]
    %v309 = vld [vmem:[#allocation5 + $0x384] sm:$0xf]
    %v310 = vld [vmem:[#allocation5 + $0x388] sm:$0xf]
    %v311 = vld [vmem:[#allocation5 + $0x38c] sm:$0xf]
    %v312 = vld [vmem:[#allocation5 + $0x390] sm:$0xf]
    %v313 = vld [vmem:[#allocation5 + $0x394] sm:$0xf]
    %v314 = vld [vmem:[#allocation5 + $0x398] sm:$0xf]
    %v315 = vld [vmem:[#allocation5 + $0x39c] sm:$0xf]
    %v316 = vld [vmem:[#allocation5 + $0x3a0] sm:$0xf]
    %v317 = vld [vmem:[#allocation5 + $0x3a4] sm:$0xf]
    %v318 = vld [vmem:[#allocation5 + $0x3a8] sm:$0xf]
    %v319 = vld [vmem:[#allocation5 + $0x3ac] sm:$0xf]
    %v320 = vld [vmem:[#allocation5 + $0x3b0] sm:$0xf]
    %v321 = vld [vmem:[#allocation5 + $0x3b4] sm:$0xf]
    %v322 = vld [vmem:[#allocation5 + $0x3b8] sm:$0xf]
    %v323 = vld [vmem:[#allocation5 + $0x3bc] sm:$0xf]
    %v324 = vld [vmem:[#allocation5 + $0x3c0] sm:$0xf]
    %v325 = vld [vmem:[#allocation5 + $0x3c4] sm:$0xf]
    %v326 = vld [vmem:[#allocation5 + $0x3c8] sm:$0xf]
    %v327 = vld [vmem:[#allocation5 + $0x3cc] sm:$0xf]
    %v328 = vld [vmem:[#allocation5 + $0x3d0] sm:$0xf]
    %v329 = vld [vmem:[#allocation5 + $0x3d4] sm:$0xf]
    %v330 = vld [vmem:[#allocation5 + $0x3d8] sm:$0xf]
    %v331 = vld [vmem:[#allocation5 + $0x3dc] sm:$0xf]
    %v332 = vld [vmem:[#allocation5 + $0x3e0] sm:$0xf]
    %v333 = vld [vmem:[#allocation5 + $0x3e4] sm:$0xf]
    %v334 = vld [vmem:[#allocation5 + $0x3e8] sm:$0xf]
    %v335 = vld [vmem:[#allocation5 + $0x3ec] sm:$0xf]
    %v336 = vld [vmem:[#allocation5 + $0x3f0] sm:$0xf]
    %v337 = vld [vmem:[#allocation5 + $0x3f4] sm:$0xf]
    %v338 = vld [vmem:[#allocation5 + $0x3f8] sm:$0xf]
    %v339 = vld [vmem:[#allocation5 + $0x3fc] sm:$0xf]
    %v340 = vld [vmem:[#allocation5 + $0x400] sm:$0xf]
    %v341 = vld [vmem:[#allocation5 + $0x404] sm:$0xf]
    %v342 = vld [vmem:[#allocation5 + $0x408] sm:$0xf]
    %v343 = vld [vmem:[#allocation5 + $0x40c] sm:$0xf]
    %v344 = vld [vmem:[#allocation5 + $0x410] sm:$0xf]
    %v345 = vld [vmem:[#allocation5 + $0x414] sm:$0xf]
    %v346 = vld [vmem:[#allocation5 + $0x418] sm:$0xf]
    %v347 = vld [vmem:[#allocation5 + $0x41c] sm:$0xf]
    %v348 = vld [vmem:[#allocation5 + $0x420] sm:$0xf]
    %v349 = vld [vmem:[#allocation5 + $0x424] sm:$0xf]
    %v350 = vld [vmem:[#allocation5 + $0x428] sm:$0xf]
    %v351 = vld [vmem:[#allocation5 + $0x42c] sm:$0xf]
    %v352 = vld [vmem:[#allocation5 + $0x430] sm:$0xf]
    %v353 = vld [vmem:[#allocation5 + $0x434] sm:$0xf]
    %v354 = vld [vmem:[#allocation5 + $0x438] sm:$0xf]
    %v355 = vld [vmem:[#allocation5 + $0x43c] sm:$0xf]
    %v356 = vld [vmem:[#allocation5 + $0x440] sm:$0xf]
    %v357 = vld [vmem:[#allocation5 + $0x444] sm:$0xf]
    %v358 = vld [vmem:[#allocation5 + $0x448] sm:$0xf]
    %v359 = vld [vmem:[#allocation5 + $0x44c] sm:$0xf]
    %v360 = vld [vmem:[#allocation5 + $0x450] sm:$0xf]
    %v361 = vld [vmem:[#allocation5 + $0x454] sm:$0xf]
    %v362 = vld [vmem:[#allocation5 + $0x458] sm:$0xf]
    %v363 = vld [vmem:[#allocation5 + $0x45c] sm:$0xf]
    %v364 = vld [vmem:[#allocation5 + $0x460] sm:$0xf]
    %v365 = vld [vmem:[#allocation5 + $0x464] sm:$0xf]
    %v366 = vld [vmem:[#allocation5 + $0x468] sm:$0xf]
    %v367 = vld [vmem:[#allocation5 + $0x46c] sm:$0xf]
    %v368 = vld [vmem:[#allocation5 + $0x470] sm:$0xf]
    %v369 = vld [vmem:[#allocation5 + $0x474] sm:$0xf]
    %v370 = vld [vmem:[#allocation5 + $0x478] sm:$0xf]
    %v371 = vld [vmem:[#allocation5 + $0x47c] sm:$0xf]
    %v372 = vld [vmem:[#allocation5 + $0x480] sm:$0xf]
    %v373 = vld [vmem:[#allocation5 + $0x484] sm:$0xf]
    %v374 = vld [vmem:[#allocation5 + $0x488] sm:$0xf]
    %v375 = vld [vmem:[#allocation5 + $0x48c] sm:$0xf]
    %v376 = vld [vmem:[#allocation5 + $0x490] sm:$0xf]
    %v377 = vld [vmem:[#allocation5 + $0x494] sm:$0xf]
    %v378 = vld [vmem:[#allocation5 + $0x498] sm:$0xf]
    %v379 = vld [vmem:[#allocation5 + $0x49c] sm:$0xf]
    %v380 = vld [vmem:[#allocation5 + $0x4a0] sm:$0xf]
    %v381 = vld [vmem:[#allocation5 + $0x4a4] sm:$0xf]
    %v382 = vld [vmem:[#allocation5 + $0x4a8] sm:$0xf]
    %v383 = vld [vmem:[#allocation5 + $0x4ac] sm:$0xf]
    %v384 = vld [vmem:[#allocation5 + $0x4b0] sm:$0xf]
    %v385 = vld [vmem:[#allocation5 + $0x4b4] sm:$0xf]
    %v386 = vld [vmem:[#allocation5 + $0x4b8] sm:$0xf]
    %v387 = vld [vmem:[#allocation5 + $0x4bc] sm:$0xf]
    %v388 = vld [vmem:[#allocation5 + $0x4c0] sm:$0xf]
    %v389 = vld [vmem:[#allocation5 + $0x4c4] sm:$0xf]
    %v390 = vld [vmem:[#allocation5 + $0x4c8] sm:$0xf]
    %v391 = vld [vmem:[#allocation5 + $0x4cc] sm:$0xf]
    %v392 = vld [vmem:[#allocation5 + $0x4d0] sm:$0xf]
    %v393 = vld [vmem:[#allocation5 + $0x4d4] sm:$0xf]
    %v394 = vld [vmem:[#allocation5 + $0x4d8] sm:$0xf]
    %v395 = vld [vmem:[#allocation5 + $0x4dc] sm:$0xf]
    %v396 = vld [vmem:[#allocation5 + $0x4e0] sm:$0xf]
    %v397 = vld [vmem:[#allocation5 + $0x4e4] sm:$0xf]
    %v398 = vld [vmem:[#allocation5 + $0x4e8] sm:$0xf]
    %v399 = vld [vmem:[#allocation5 + $0x4ec] sm:$0xf]
    %v400 = vld [vmem:[#allocation5 + $0x4f0] sm:$0xf]
    %v401 = vld [vmem:[#allocation5 + $0x4f4] sm:$0xf]
    %v402 = vld [vmem:[#allocation5 + $0x4f8] sm:$0xf]
    %v403 = vld [vmem:[#allocation5 + $0x4fc] sm:$0xf]
    %v404 = vld [vmem:[#allocation5 + $0x500] sm:$0xf]
    %v405 = vld [vmem:[#allocation5 + $0x504] sm:$0xf]
    %v406 = vld [vmem:[#allocation5 + $0x508] sm:$0xf]
    %v407 = vld [vmem:[#allocation5 + $0x50c] sm:$0xf]
    %v408 = vld [vmem:[#allocation5 + $0x510] sm:$0xf]
    %v409 = vld [vmem:[#allocation5 + $0x514] sm:$0xf]
    %v410 = vld [vmem:[#allocation5 + $0x518] sm:$0xf]
    %v411 = vld [vmem:[#allocation5 + $0x51c] sm:$0xf]
    %v412 = vld [vmem:[#allocation5 + $0x520] sm:$0xf]
    %v413 = vld [vmem:[#allocation5 + $0x524] sm:$0xf]
    %v414 = vld [vmem:[#allocation5 + $0x528] sm:$0xf]
    %v415 = vld [vmem:[#allocation5 + $0x52c] sm:$0xf]
    %v416 = vld [vmem:[#allocation5 + $0x530] sm:$0xf]
    %v417 = vld [vmem:[#allocation5 + $0x534] sm:$0xf]
    %v418 = vld [vmem:[#allocation5 + $0x538] sm:$0xf]
    %v419 = vld [vmem:[#allocation5 + $0x53c] sm:$0xf]
    %v420 = vld [vmem:[#allocation5 + $0x540] sm:$0xf]
    %v421 = vld [vmem:[#allocation5 + $0x544] sm:$0xf]
    %v422 = vld [vmem:[#allocation5 + $0x548] sm:$0xf]
    %v423 = vld [vmem:[#allocation5 + $0x54c] sm:$0xf]
    %v424 = vld [vmem:[#allocation5 + $0x550] sm:$0xf]
    %v425 = vld [vmem:[#allocation5 + $0x554] sm:$0xf]
    %v426 = vld [vmem:[#allocation5 + $0x558] sm:$0xf]
    %v427 = vld [vmem:[#allocation5 + $0x55c] sm:$0xf]
    %v428 = vld [vmem:[#allocation5 + $0x560] sm:$0xf]
    %v429 = vld [vmem:[#allocation5 + $0x564] sm:$0xf]
    %v430 = vld [vmem:[#allocation5 + $0x568] sm:$0xf]
    %v431 = vld [vmem:[#allocation5 + $0x56c] sm:$0xf]
    %v432 = vld [vmem:[#allocation5 + $0x570] sm:$0xf]
    %v433 = vld [vmem:[#allocation5 + $0x574] sm:$0xf]
    %v434 = vld [vmem:[#allocation5 + $0x578] sm:$0xf]
    %v435 = vld [vmem:[#allocation5 + $0x57c] sm:$0xf]
    %v436 = vld [vmem:[#allocation5 + $0x580] sm:$0xf]
    %v437 = vld [vmem:[#allocation5 + $0x584] sm:$0xf]
    %v438 = vld [vmem:[#allocation5 + $0x588] sm:$0xf]
    %v439 = vld [vmem:[#allocation5 + $0x58c] sm:$0xf]
    %v440 = vld [vmem:[#allocation5 + $0x590] sm:$0xf]
    %v441 = vld [vmem:[#allocation5 + $0x594] sm:$0xf]
    %v442 = vld [vmem:[#allocation5 + $0x598] sm:$0xf]
    %v443 = vld [vmem:[#allocation5 + $0x59c] sm:$0xf]
    %v444 = vld [vmem:[#allocation5 + $0x5a0] sm:$0xf]
    %v445 = vld [vmem:[#allocation5 + $0x5a4] sm:$0xf]
    %v446 = vld [vmem:[#allocation5 + $0x5a8] sm:$0xf]
    %v447 = vld [vmem:[#allocation5 + $0x5ac] sm:$0xf]
    %v448 = vld [vmem:[#allocation5 + $0x5b0] sm:$0xf]
    %v449 = vld [vmem:[#allocation5 + $0x5b4] sm:$0xf]
    %v450 = vld [vmem:[#allocation5 + $0x5b8] sm:$0xf]
    %v451 = vld [vmem:[#allocation5 + $0x5bc] sm:$0xf]
    %v452 = vld [vmem:[#allocation5 + $0x5c0] sm:$0xf]
    %v453 = vld [vmem:[#allocation5 + $0x5c4] sm:$0xf]
    %v454 = vld [vmem:[#allocation5 + $0x5c8] sm:$0xf]
    %v455 = vld [vmem:[#allocation5 + $0x5cc] sm:$0xf]
    %v456 = vld [vmem:[#allocation5 + $0x5d0] sm:$0xf]
    %v457 = vld [vmem:[#allocation5 + $0x5d4] sm:$0xf]
    %v458 = vld [vmem:[#allocation5 + $0x5d8] sm:$0xf]
    %v459 = vld [vmem:[#allocation5 + $0x5dc] sm:$0xf]
    %v460 = vld [vmem:[#allocation5 + $0x5e0] sm:$0xf]
    %v461 = vld [vmem:[#allocation5 + $0x5e4] sm:$0xf]
    %v462 = vld [vmem:[#allocation5 + $0x5e8] sm:$0xf]
    %v463 = vld [vmem:[#allocation5 + $0x5ec] sm:$0xf]
    %v464 = vld [vmem:[#allocation5 + $0x5f0] sm:$0xf]
    %v465 = vld [vmem:[#allocation5 + $0x5f4] sm:$0xf]
    %v466 = vld [vmem:[#allocation5 + $0x5f8] sm:$0xf]
    %v467 = vld [vmem:[#allocation5 + $0x5fc] sm:$0xf]
    %v468 = vld [vmem:[%s2] sm:$0x1]
    %v470 = vlaneseq
    %v471 = vshrl.u32 %v470, 7
    %v472 = vsub.s32 0, %v471
    %v473 = vrot.slane %v468, %v472
    %v478 = vcombine.high %v81, %v81
    %v480 = vunpack.c.l.s4 1966171168
    %v481 = vunpack.c.0.s8 %v480
    %v482 = vlaneseq
    %v483 = vshrl.u32 %v482, 7
    %v484 = vsub.s32 %v481, %v483
    %v485 = vrot.slane %v81, %v484
    %v487 = vunpack.c.l.s4 1966171168
    %v488 = vunpack.c.0.s8 %v487
    %v489 = vlaneseq
    %v490 = vshrl.u32 %v489, 7
    %v491 = vsub.s32 %v488, %v490
    %v492 = vrot.slane %v478, %v491
    %v493 = vcombine.high %v485, %v485
    %v494 = vcombine.high %v492, %v492
    %v496 = vunpack.c.l.s4 1966171168
    %v497 = vunpack.c.0.s8 %v496
    %v498 = vlaneseq
    %v499 = vshrl.u32 %v498, 7
    %v500 = vsub.s32 %v497, %v499
    %v501 = vrot.slane %v485, %v500
    %v503 = vunpack.c.l.s4 1966171168
    %v504 = vunpack.c.0.s8 %v503
    %v505 = vlaneseq
    %v506 = vshrl.u32 %v505, 7
    %v507 = vsub.s32 %v504, %v506
    %v508 = vrot.slane %v492, %v507
    %v510 = vunpack.c.l.s4 1966171168
    %v511 = vunpack.c.0.s8 %v510
    %v512 = vlaneseq
    %v513 = vshrl.u32 %v512, 7
    %v514 = vsub.s32 %v511, %v513
    %v515 = vrot.slane %v493, %v514
    %v517 = vunpack.c.l.s4 1966171168
    %v518 = vunpack.c.0.s8 %v517
    %v519 = vlaneseq
    %v520 = vshrl.u32 %v519, 7
    %v521 = vsub.s32 %v518, %v520
    %v522 = vrot.slane %v494, %v521
    %v523 = vcombine.high %v501, %v501
    %v524 = vcombine.high %v508, %v508
    %v525 = vcombine.high %v515, %v515
    %v526 = vcombine.high %v522, %v522
    %v527 = vcombine.high %v82, %v82
    %v529 = vunpack.c.l.s4 1966171168
    %v530 = vunpack.c.0.s8 %v529
    %v531 = vlaneseq
    %v532 = vshrl.u32 %v531, 7
    %v533 = vsub.s32 %v530, %v532
    %v534 = vrot.slane %v82, %v533
    %v536 = vunpack.c.l.s4 1966171168
    %v537 = vunpack.c.0.s8 %v536
    %v538 = vlaneseq
    %v539 = vshrl.u32 %v538, 7
    %v540 = vsub.s32 %v537, %v539
    %v541 = vrot.slane %v527, %v540
    %v542 = vcombine.high %v534, %v534
    %v543 = vcombine.high %v541, %v541
    %v545 = vunpack.c.l.s4 1966171168
    %v546 = vunpack.c.0.s8 %v545
    %v547 = vlaneseq
    %v548 = vshrl.u32 %v547, 7
    %v549 = vsub.s32 %v546, %v548
    %v550 = vrot.slane %v534, %v549
    %v552 = vunpack.c.l.s4 1966171168
    %v553 = vunpack.c.0.s8 %v552
    %v554 = vlaneseq
    %v555 = vshrl.u32 %v554, 7
    %v556 = vsub.s32 %v553, %v555
    %v557 = vrot.slane %v541, %v556
    %v559 = vunpack.c.l.s4 1966171168
    %v560 = vunpack.c.0.s8 %v559
    %v561 = vlaneseq
    %v562 = vshrl.u32 %v561, 7
    %v563 = vsub.s32 %v560, %v562
    %v564 = vrot.slane %v542, %v563
    %v566 = vunpack.c.l.s4 1966171168
    %v567 = vunpack.c.0.s8 %v566
    %v568 = vlaneseq
    %v569 = vshrl.u32 %v568, 7
    %v570 = vsub.s32 %v567, %v569
    %v571 = vrot.slane %v543, %v570
    %v572 = vcombine.high %v550, %v550
    %v573 = vcombine.high %v557, %v557
    %v574 = vcombine.high %v564, %v564
    %v575 = vcombine.high %v571, %v571
    %v576 = vcombine.high %v83, %v83
    %v578 = vunpack.c.l.s4 1966171168
    %v579 = vunpack.c.0.s8 %v578
    %v580 = vlaneseq
    %v581 = vshrl.u32 %v580, 7
    %v582 = vsub.s32 %v579, %v581
    %v583 = vrot.slane %v83, %v582
    %v585 = vunpack.c.l.s4 1966171168
    %v586 = vunpack.c.0.s8 %v585
    %v587 = vlaneseq
    %v588 = vshrl.u32 %v587, 7
    %v589 = vsub.s32 %v586, %v588
    %v590 = vrot.slane %v576, %v589
    %v591 = vcombine.high %v583, %v583
    %v592 = vcombine.high %v590, %v590
    %v594 = vunpack.c.l.s4 1966171168
    %v595 = vunpack.c.0.s8 %v594
    %v596 = vlaneseq
    %v597 = vshrl.u32 %v596, 7
    %v598 = vsub.s32 %v595, %v597
    %v599 = vrot.slane %v583, %v598
    %v601 = vunpack.c.l.s4 1966171168
    %v602 = vunpack.c.0.s8 %v601
    %v603 = vlaneseq
    %v604 = vshrl.u32 %v603, 7
    %v605 = vsub.s32 %v602, %v604
    %v606 = vrot.slane %v590, %v605
    %v608 = vunpack.c.l.s4 1966171168
    %v609 = vunpack.c.0.s8 %v608
    %v610 = vlaneseq
    %v611 = vshrl.u32 %v610, 7
    %v612 = vsub.s32 %v609, %v611
    %v613 = vrot.slane %v591, %v612
    %v615 = vunpack.c.l.s4 1966171168
    %v616 = vunpack.c.0.s8 %v615
    %v617 = vlaneseq
    %v618 = vshrl.u32 %v617, 7
    %v619 = vsub.s32 %v616, %v618
    %v620 = vrot.slane %v592, %v619
    %v621 = vcombine.high %v599, %v599
    %v622 = vcombine.high %v606, %v606
    %v623 = vcombine.high %v613, %v613
    %v624 = vcombine.high %v620, %v620
    %v1033 = vunpack.c.l.b16 %v84
    %v1034 = vunpack.c.l.b16 %v85
    %v1035 = vunpack.c.l.b16 %v86
    %v1036 = vunpack.c.l.b16 %v87
    %v1037 = vunpack.c.l.b16 %v88
    %v1038 = vunpack.c.l.b16 %v89
    %v1039 = vunpack.c.l.b16 %v90
    %v1040 = vunpack.c.l.b16 %v91
    %v1041 = vunpack.c.l.b16 %v92
    %v1042 = vunpack.c.l.b16 %v93
    %v1043 = vunpack.c.l.b16 %v94
    %v1044 = vunpack.c.l.b16 %v95
    %v1045 = vunpack.c.l.b16 %v96
    %v1046 = vunpack.c.l.b16 %v97
    %v1047 = vunpack.c.l.b16 %v98
    %v1048 = vunpack.c.l.b16 %v99
    %v1049 = vunpack.c.l.b16 %v100
    %v1050 = vunpack.c.l.b16 %v101
    %v1051 = vunpack.c.l.b16 %v102
    %v1052 = vunpack.c.l.b16 %v103
    %v1053 = vunpack.c.l.b16 %v104
    %v1054 = vunpack.c.l.b16 %v105
    %v1055 = vunpack.c.l.b16 %v106
    %v1056 = vunpack.c.l.b16 %v107
    %v1057 = vunpack.c.l.b16 %v108
    %v1058 = vunpack.c.l.b16 %v109
    %v1059 = vunpack.c.l.b16 %v110
    %v1060 = vunpack.c.l.b16 %v111
    %v1061 = vunpack.c.l.b16 %v112
    %v1062 = vunpack.c.l.b16 %v113
    %v1063 = vunpack.c.l.b16 %v114
    %v1064 = vunpack.c.l.b16 %v115
    %v1065 = vunpack.c.l.b16 %v116
    %v1066 = vunpack.c.l.b16 %v117
    %v1067 = vunpack.c.l.b16 %v118
    %v1068 = vunpack.c.l.b16 %v119
    %v1069 = vunpack.c.l.b16 %v120
    %v1070 = vunpack.c.l.b16 %v121
    %v1071 = vunpack.c.l.b16 %v122
    %v1072 = vunpack.c.l.b16 %v123
    %v1073 = vunpack.c.l.b16 %v124
    %v1074 = vunpack.c.l.b16 %v125
    %v1075 = vunpack.c.l.b16 %v126
    %v1076 = vunpack.c.l.b16 %v127
    %v1077 = vunpack.c.l.b16 %v128
    %v1078 = vunpack.c.l.b16 %v129
    %v1079 = vunpack.c.l.b16 %v130
    %v1080 = vunpack.c.l.b16 %v131
    %v1081 = vunpack.c.l.b16 %v132
    %v1082 = vunpack.c.l.b16 %v133
    %v1083 = vunpack.c.l.b16 %v134
    %v1084 = vunpack.c.l.b16 %v135
    %v1085 = vunpack.c.l.b16 %v136
    %v1086 = vunpack.c.l.b16 %v137
    %v1087 = vunpack.c.l.b16 %v138
    %v1088 = vunpack.c.l.b16 %v139
    %v1089 = vunpack.c.l.b16 %v140
    %v1090 = vunpack.c.l.b16 %v141
    %v1091 = vunpack.c.l.b16 %v142
    %v1092 = vunpack.c.l.b16 %v143
    %v1093 = vunpack.c.l.b16 %v144
    %v1094 = vunpack.c.l.b16 %v145
    %v1095 = vunpack.c.l.b16 %v146
    %v1096 = vunpack.c.l.b16 %v147
    %v1097 = vunpack.c.l.b16 %v148
    %v1098 = vunpack.c.l.b16 %v149
    %v1099 = vunpack.c.l.b16 %v150
    %v1100 = vunpack.c.l.b16 %v151
    %v1101 = vunpack.c.l.b16 %v152
    %v1102 = vunpack.c.l.b16 %v153
    %v1103 = vunpack.c.l.b16 %v154
    %v1104 = vunpack.c.l.b16 %v155
    %v1105 = vunpack.c.l.b16 %v156
    %v1106 = vunpack.c.l.b16 %v157
    %v1107 = vunpack.c.l.b16 %v158
    %v1108 = vunpack.c.l.b16 %v159
    %v1109 = vunpack.c.l.b16 %v160
    %v1110 = vunpack.c.l.b16 %v161
    %v1111 = vunpack.c.l.b16 %v162
    %v1112 = vunpack.c.l.b16 %v163
    %v1113 = vunpack.c.l.b16 %v164
    %v1114 = vunpack.c.l.b16 %v165
    %v1115 = vunpack.c.l.b16 %v166
    %v1116 = vunpack.c.l.b16 %v167
    %v1117 = vunpack.c.l.b16 %v168
    %v1118 = vunpack.c.l.b16 %v169
    %v1119 = vunpack.c.l.b16 %v170
    %v1120 = vunpack.c.l.b16 %v171
    %v1121 = vunpack.c.l.b16 %v172
    %v1122 = vunpack.c.l.b16 %v173
    %v1123 = vunpack.c.l.b16 %v174
    %v1124 = vunpack.c.l.b16 %v175
    %v1125 = vunpack.c.l.b16 %v176
    %v1126 = vunpack.c.l.b16 %v177
    %v1127 = vunpack.c.l.b16 %v178
    %v1128 = vunpack.c.l.b16 %v179
    %v1129 = vunpack.c.l.b16 %v180
    %v1130 = vunpack.c.l.b16 %v181
    %v1131 = vunpack.c.l.b16 %v182
    %v1132 = vunpack.c.l.b16 %v183
    %v1133 = vunpack.c.l.b16 %v184
    %v1134 = vunpack.c.l.b16 %v185
    %v1135 = vunpack.c.l.b16 %v186
    %v1136 = vunpack.c.l.b16 %v187
    %v1137 = vunpack.c.l.b16 %v188
    %v1138 = vunpack.c.l.b16 %v189
    %v1139 = vunpack.c.l.b16 %v190
    %v1140 = vunpack.c.l.b16 %v191
    %v1141 = vunpack.c.l.b16 %v192
    %v1142 = vunpack.c.l.b16 %v193
    %v1143 = vunpack.c.l.b16 %v194
    %v1144 = vunpack.c.l.b16 %v195
    %v1145 = vunpack.c.l.b16 %v196
    %v1146 = vunpack.c.l.b16 %v197
    %v1147 = vunpack.c.l.b16 %v198
    %v1148 = vunpack.c.l.b16 %v199
    %v1149 = vunpack.c.l.b16 %v200
    %v1150 = vunpack.c.l.b16 %v201
    %v1151 = vunpack.c.l.b16 %v202
    %v1152 = vunpack.c.l.b16 %v203
    %v1153 = vunpack.c.l.b16 %v204
    %v1154 = vunpack.c.l.b16 %v205
    %v1155 = vunpack.c.l.b16 %v206
    %v1156 = vunpack.c.l.b16 %v207
    %v1157 = vunpack.c.l.b16 %v208
    %v1158 = vunpack.c.l.b16 %v209
    %v1159 = vunpack.c.l.b16 %v210
    %v1160 = vunpack.c.l.b16 %v211
    %v1161 = vunpack.c.l.b16 %v212
    %v1162 = vunpack.c.l.b16 %v213
    %v1163 = vunpack.c.l.b16 %v214
    %v1164 = vunpack.c.l.b16 %v215
    %v1165 = vunpack.c.l.b16 %v216
    %v1166 = vunpack.c.l.b16 %v217
    %v1167 = vunpack.c.l.b16 %v218
    %v1168 = vunpack.c.l.b16 %v219
    %v1169 = vunpack.c.l.b16 %v220
    %v1170 = vunpack.c.l.b16 %v221
    %v1171 = vunpack.c.l.b16 %v222
    %v1172 = vunpack.c.l.b16 %v223
    %v1173 = vunpack.c.l.b16 %v224
    %v1174 = vunpack.c.l.b16 %v225
    %v1175 = vunpack.c.l.b16 %v226
    %v1176 = vunpack.c.l.b16 %v227
    %v1177 = vunpack.c.l.b16 %v228
    %v1178 = vunpack.c.l.b16 %v229
    %v1179 = vunpack.c.l.b16 %v230
    %v1180 = vunpack.c.l.b16 %v231
    %v1181 = vunpack.c.l.b16 %v232
    %v1182 = vunpack.c.l.b16 %v233
    %v1183 = vunpack.c.l.b16 %v234
    %v1184 = vunpack.c.l.b16 %v235
    %v1185 = vunpack.c.l.b16 %v236
    %v1186 = vunpack.c.l.b16 %v237
    %v1187 = vunpack.c.l.b16 %v238
    %v1188 = vunpack.c.l.b16 %v239
    %v1189 = vunpack.c.l.b16 %v240
    %v1190 = vunpack.c.l.b16 %v241
    %v1191 = vunpack.c.l.b16 %v242
    %v1192 = vunpack.c.l.b16 %v243
    %v1193 = vunpack.c.l.b16 %v244
    %v1194 = vunpack.c.l.b16 %v245
    %v1195 = vunpack.c.l.b16 %v246
    %v1196 = vunpack.c.l.b16 %v247
    %v1197 = vunpack.c.l.b16 %v248
    %v1198 = vunpack.c.l.b16 %v249
    %v1199 = vunpack.c.l.b16 %v250
    %v1200 = vunpack.c.l.b16 %v251
    %v1201 = vunpack.c.l.b16 %v252
    %v1202 = vunpack.c.l.b16 %v253
    %v1203 = vunpack.c.l.b16 %v254
    %v1204 = vunpack.c.l.b16 %v255
    %v1205 = vunpack.c.l.b16 %v256
    %v1206 = vunpack.c.l.b16 %v257
    %v1207 = vunpack.c.l.b16 %v258
    %v1208 = vunpack.c.l.b16 %v259
    %v1209 = vunpack.c.l.b16 %v260
    %v1210 = vunpack.c.l.b16 %v261
    %v1211 = vunpack.c.l.b16 %v262
    %v1212 = vunpack.c.l.b16 %v263
    %v1213 = vunpack.c.l.b16 %v264
    %v1214 = vunpack.c.l.b16 %v265
    %v1215 = vunpack.c.l.b16 %v266
    %v1216 = vunpack.c.l.b16 %v267
    %v1217 = vunpack.c.l.b16 %v268
    %v1218 = vunpack.c.l.b16 %v269
    %v1219 = vunpack.c.l.b16 %v270
    %v1220 = vunpack.c.l.b16 %v271
    %v1221 = vunpack.c.l.b16 %v272
    %v1222 = vunpack.c.l.b16 %v273
    %v1223 = vunpack.c.l.b16 %v274
    %v1224 = vunpack.c.l.b16 %v275
    %v1225 = vunpack.c.l.b16 %v276
    %v1226 = vunpack.c.l.b16 %v277
    %v1227 = vunpack.c.l.b16 %v278
    %v1228 = vunpack.c.l.b16 %v279
    %v1229 = vunpack.c.l.b16 %v280
    %v1230 = vunpack.c.l.b16 %v281
    %v1231 = vunpack.c.l.b16 %v282
    %v1232 = vunpack.c.l.b16 %v283
    %v1233 = vunpack.c.l.b16 %v284
    %v1234 = vunpack.c.l.b16 %v285
    %v1235 = vunpack.c.l.b16 %v286
    %v1236 = vunpack.c.l.b16 %v287
    %v1237 = vunpack.c.l.b16 %v288
    %v1238 = vunpack.c.l.b16 %v289
    %v1239 = vunpack.c.l.b16 %v290
    %v1240 = vunpack.c.l.b16 %v291
    %v1241 = vunpack.c.l.b16 %v292
    %v1242 = vunpack.c.l.b16 %v293
    %v1243 = vunpack.c.l.b16 %v294
    %v1244 = vunpack.c.l.b16 %v295
    %v1245 = vunpack.c.l.b16 %v296
    %v1246 = vunpack.c.l.b16 %v297
    %v1247 = vunpack.c.l.b16 %v298
    %v1248 = vunpack.c.l.b16 %v299
    %v1249 = vunpack.c.l.b16 %v300
    %v1250 = vunpack.c.l.b16 %v301
    %v1251 = vunpack.c.l.b16 %v302
    %v1252 = vunpack.c.l.b16 %v303
    %v1253 = vunpack.c.l.b16 %v304
    %v1254 = vunpack.c.l.b16 %v305
    %v1255 = vunpack.c.l.b16 %v306
    %v1256 = vunpack.c.l.b16 %v307
    %v1257 = vunpack.c.l.b16 %v308
    %v1258 = vunpack.c.l.b16 %v309
    %v1259 = vunpack.c.l.b16 %v310
    %v1260 = vunpack.c.l.b16 %v311
    %v1261 = vunpack.c.l.b16 %v312
    %v1262 = vunpack.c.l.b16 %v313
    %v1263 = vunpack.c.l.b16 %v314
    %v1264 = vunpack.c.l.b16 %v315
    %v1265 = vunpack.c.l.b16 %v316
    %v1266 = vunpack.c.l.b16 %v317
    %v1267 = vunpack.c.l.b16 %v318
    %v1268 = vunpack.c.l.b16 %v319
    %v1269 = vunpack.c.l.b16 %v320
    %v1270 = vunpack.c.l.b16 %v321
    %v1271 = vunpack.c.l.b16 %v322
    %v1272 = vunpack.c.l.b16 %v323
    %v1273 = vunpack.c.l.b16 %v324
    %v1274 = vunpack.c.l.b16 %v325
    %v1275 = vunpack.c.l.b16 %v326
    %v1276 = vunpack.c.l.b16 %v327
    %v1277 = vunpack.c.l.b16 %v328
    %v1278 = vunpack.c.l.b16 %v329
    %v1279 = vunpack.c.l.b16 %v330
    %v1280 = vunpack.c.l.b16 %v331
    %v1281 = vunpack.c.l.b16 %v332
    %v1282 = vunpack.c.l.b16 %v333
    %v1283 = vunpack.c.l.b16 %v334
    %v1284 = vunpack.c.l.b16 %v335
    %v1285 = vunpack.c.l.b16 %v336
    %v1286 = vunpack.c.l.b16 %v337
    %v1287 = vunpack.c.l.b16 %v338
    %v1288 = vunpack.c.l.b16 %v339
    %v1289 = vunpack.c.l.b16 %v340
    %v1290 = vunpack.c.l.b16 %v341
    %v1291 = vunpack.c.l.b16 %v342
    %v1292 = vunpack.c.l.b16 %v343
    %v1293 = vunpack.c.l.b16 %v344
    %v1294 = vunpack.c.l.b16 %v345
    %v1295 = vunpack.c.l.b16 %v346
    %v1296 = vunpack.c.l.b16 %v347
    %v1297 = vunpack.c.l.b16 %v348
    %v1298 = vunpack.c.l.b16 %v349
    %v1299 = vunpack.c.l.b16 %v350
    %v1300 = vunpack.c.l.b16 %v351
    %v1301 = vunpack.c.l.b16 %v352
    %v1302 = vunpack.c.l.b16 %v353
    %v1303 = vunpack.c.l.b16 %v354
    %v1304 = vunpack.c.l.b16 %v355
    %v1305 = vunpack.c.l.b16 %v356
    %v1306 = vunpack.c.l.b16 %v357
    %v1307 = vunpack.c.l.b16 %v358
    %v1308 = vunpack.c.l.b16 %v359
    %v1309 = vunpack.c.l.b16 %v360
    %v1310 = vunpack.c.l.b16 %v361
    %v1311 = vunpack.c.l.b16 %v362
    %v1312 = vunpack.c.l.b16 %v363
    %v1313 = vunpack.c.l.b16 %v364
    %v1314 = vunpack.c.l.b16 %v365
    %v1315 = vunpack.c.l.b16 %v366
    %v1316 = vunpack.c.l.b16 %v367
    %v1317 = vunpack.c.l.b16 %v368
    %v1318 = vunpack.c.l.b16 %v369
    %v1319 = vunpack.c.l.b16 %v370
    %v1320 = vunpack.c.l.b16 %v371
    %v1321 = vunpack.c.l.b16 %v372
    %v1322 = vunpack.c.l.b16 %v373
    %v1323 = vunpack.c.l.b16 %v374
    %v1324 = vunpack.c.l.b16 %v375
    %v1325 = vunpack.c.l.b16 %v376
    %v1326 = vunpack.c.l.b16 %v377
    %v1327 = vunpack.c.l.b16 %v378
    %v1328 = vunpack.c.l.b16 %v379
    %v1329 = vunpack.c.l.b16 %v380
    %v1330 = vunpack.c.l.b16 %v381
    %v1331 = vunpack.c.l.b16 %v382
    %v1332 = vunpack.c.l.b16 %v383
    %v1333 = vunpack.c.l.b16 %v384
    %v1334 = vunpack.c.l.b16 %v385
    %v1335 = vunpack.c.l.b16 %v386
    %v1336 = vunpack.c.l.b16 %v387
    %v1337 = vunpack.c.l.b16 %v388
    %v1338 = vunpack.c.l.b16 %v389
    %v1339 = vunpack.c.l.b16 %v390
    %v1340 = vunpack.c.l.b16 %v391
    %v1341 = vunpack.c.l.b16 %v392
    %v1342 = vunpack.c.l.b16 %v393
    %v1343 = vunpack.c.l.b16 %v394
    %v1344 = vunpack.c.l.b16 %v395
    %v1345 = vunpack.c.l.b16 %v396
    %v1346 = vunpack.c.l.b16 %v397
    %v1347 = vunpack.c.l.b16 %v398
    %v1348 = vunpack.c.l.b16 %v399
    %v1349 = vunpack.c.l.b16 %v400
    %v1350 = vunpack.c.l.b16 %v401
    %v1351 = vunpack.c.l.b16 %v402
    %v1352 = vunpack.c.l.b16 %v403
    %v1353 = vunpack.c.l.b16 %v404
    %v1354 = vunpack.c.l.b16 %v405
    %v1355 = vunpack.c.l.b16 %v406
    %v1356 = vunpack.c.l.b16 %v407
    %v1357 = vunpack.c.l.b16 %v408
    %v1358 = vunpack.c.l.b16 %v409
    %v1359 = vunpack.c.l.b16 %v410
    %v1360 = vunpack.c.l.b16 %v411
    %v1361 = vunpack.c.l.b16 %v412
    %v1362 = vunpack.c.l.b16 %v413
    %v1363 = vunpack.c.l.b16 %v414
    %v1364 = vunpack.c.l.b16 %v415
    %v1365 = vunpack.c.l.b16 %v416
    %v1366 = vunpack.c.l.b16 %v417
    %v1367 = vunpack.c.l.b16 %v418
    %v1368 = vunpack.c.l.b16 %v419
    %v1369 = vunpack.c.l.b16 %v420
    %v1370 = vunpack.c.l.b16 %v421
    %v1371 = vunpack.c.l.b16 %v422
    %v1372 = vunpack.c.l.b16 %v423
    %v1373 = vunpack.c.l.b16 %v424
    %v1374 = vunpack.c.l.b16 %v425
    %v1375 = vunpack.c.l.b16 %v426
    %v1376 = vunpack.c.l.b16 %v427
    %v1377 = vunpack.c.l.b16 %v428
    %v1378 = vunpack.c.l.b16 %v429
    %v1379 = vunpack.c.l.b16 %v430
    %v1380 = vunpack.c.l.b16 %v431
    %v1381 = vunpack.c.l.b16 %v432
    %v1382 = vunpack.c.l.b16 %v433
    %v1383 = vunpack.c.l.b16 %v434
    %v1384 = vunpack.c.l.b16 %v435
    %v1385 = vunpack.c.l.b16 %v436
    %v1386 = vunpack.c.l.b16 %v437
    %v1387 = vunpack.c.l.b16 %v438
    %v1388 = vunpack.c.l.b16 %v439
    %v1389 = vunpack.c.l.b16 %v440
    %v1390 = vunpack.c.l.b16 %v441
    %v1391 = vunpack.c.l.b16 %v442
    %v1392 = vunpack.c.l.b16 %v443
    %v1393 = vunpack.c.l.b16 %v444
    %v1394 = vunpack.c.l.b16 %v445
    %v1395 = vunpack.c.l.b16 %v446
    %v1396 = vunpack.c.l.b16 %v447
    %v1397 = vunpack.c.l.b16 %v448
    %v1398 = vunpack.c.l.b16 %v449
    %v1399 = vunpack.c.l.b16 %v450
    %v1400 = vunpack.c.l.b16 %v451
    %v1401 = vunpack.c.l.b16 %v452
    %v1402 = vunpack.c.l.b16 %v453
    %v1403 = vunpack.c.l.b16 %v454
    %v1404 = vunpack.c.l.b16 %v455
    %v1405 = vunpack.c.l.b16 %v456
    %v1406 = vunpack.c.l.b16 %v457
    %v1407 = vunpack.c.l.b16 %v458
    %v1408 = vunpack.c.l.b16 %v459
    %v1409 = vunpack.c.l.b16 %v460
    %v1410 = vunpack.c.l.b16 %v461
    %v1411 = vunpack.c.l.b16 %v462
    %v1412 = vunpack.c.l.b16 %v463
    %v1413 = vunpack.c.l.b16 %v464
    %v1414 = vunpack.c.l.b16 %v465
    %v1415 = vunpack.c.l.b16 %v466
    %v1416 = vunpack.c.l.b16 %v467
    %v1417 = vpack.c.b16 %v1034, %v1033
    %v1418 = vpack.c.b16 %v1036, %v1035
    %v1419 = vpack.c.b16 %v1038, %v1037
    %v1420 = vpack.c.b16 %v1040, %v1039
    %v1421 = vpack.c.b16 %v1042, %v1041
    %v1422 = vpack.c.b16 %v1044, %v1043
    %v1423 = vpack.c.b16 %v1046, %v1045
    %v1424 = vpack.c.b16 %v1048, %v1047
    %v1425 = vpack.c.b16 %v1050, %v1049
    %v1426 = vpack.c.b16 %v1052, %v1051
    %v1427 = vpack.c.b16 %v1054, %v1053
    %v1428 = vpack.c.b16 %v1056, %v1055
    %v1429 = vpack.c.b16 %v1058, %v1057
    %v1430 = vpack.c.b16 %v1060, %v1059
    %v1431 = vpack.c.b16 %v1062, %v1061
    %v1432 = vpack.c.b16 %v1064, %v1063
    %v1433 = vpack.c.b16 %v1066, %v1065
    %v1434 = vpack.c.b16 %v1068, %v1067
    %v1435 = vpack.c.b16 %v1070, %v1069
    %v1436 = vpack.c.b16 %v1072, %v1071
    %v1437 = vpack.c.b16 %v1074, %v1073
    %v1438 = vpack.c.b16 %v1076, %v1075
    %v1439 = vpack.c.b16 %v1078, %v1077
    %v1440 = vpack.c.b16 %v1080, %v1079
    %v1441 = vpack.c.b16 %v1082, %v1081
    %v1442 = vpack.c.b16 %v1084, %v1083
    %v1443 = vpack.c.b16 %v1086, %v1085
    %v1444 = vpack.c.b16 %v1088, %v1087
    %v1445 = vpack.c.b16 %v1090, %v1089
    %v1446 = vpack.c.b16 %v1092, %v1091
    %v1447 = vpack.c.b16 %v1094, %v1093
    %v1448 = vpack.c.b16 %v1096, %v1095
    %v1449 = vpack.c.b16 %v1098, %v1097
    %v1450 = vpack.c.b16 %v1100, %v1099
    %v1451 = vpack.c.b16 %v1102, %v1101
    %v1452 = vpack.c.b16 %v1104, %v1103
    %v1453 = vpack.c.b16 %v1106, %v1105
    %v1454 = vpack.c.b16 %v1108, %v1107
    %v1455 = vpack.c.b16 %v1110, %v1109
    %v1456 = vpack.c.b16 %v1112, %v1111
    %v1457 = vpack.c.b16 %v1114, %v1113
    %v1458 = vpack.c.b16 %v1116, %v1115
    %v1459 = vpack.c.b16 %v1118, %v1117
    %v1460 = vpack.c.b16 %v1120, %v1119
    %v1461 = vpack.c.b16 %v1122, %v1121
    %v1462 = vpack.c.b16 %v1124, %v1123
    %v1463 = vpack.c.b16 %v1126, %v1125
    %v1464 = vpack.c.b16 %v1128, %v1127
    %v1465 = vpack.c.b16 %v1130, %v1129
    %v1466 = vpack.c.b16 %v1132, %v1131
    %v1467 = vpack.c.b16 %v1134, %v1133
    %v1468 = vpack.c.b16 %v1136, %v1135
    %v1469 = vpack.c.b16 %v1138, %v1137
    %v1470 = vpack.c.b16 %v1140, %v1139
    %v1471 = vpack.c.b16 %v1142, %v1141
    %v1472 = vpack.c.b16 %v1144, %v1143
    %v1473 = vpack.c.b16 %v1146, %v1145
    %v1474 = vpack.c.b16 %v1148, %v1147
    %v1475 = vpack.c.b16 %v1150, %v1149
    %v1476 = vpack.c.b16 %v1152, %v1151
    %v1477 = vpack.c.b16 %v1154, %v1153
    %v1478 = vpack.c.b16 %v1156, %v1155
    %v1479 = vpack.c.b16 %v1158, %v1157
    %v1480 = vpack.c.b16 %v1160, %v1159
    %v1481 = vpack.c.b16 %v1162, %v1161
    %v1482 = vpack.c.b16 %v1164, %v1163
    %v1483 = vpack.c.b16 %v1166, %v1165
    %v1484 = vpack.c.b16 %v1168, %v1167
    %v1485 = vpack.c.b16 %v1170, %v1169
    %v1486 = vpack.c.b16 %v1172, %v1171
    %v1487 = vpack.c.b16 %v1174, %v1173
    %v1488 = vpack.c.b16 %v1176, %v1175
    %v1489 = vpack.c.b16 %v1178, %v1177
    %v1490 = vpack.c.b16 %v1180, %v1179
    %v1491 = vpack.c.b16 %v1182, %v1181
    %v1492 = vpack.c.b16 %v1184, %v1183
    %v1493 = vpack.c.b16 %v1186, %v1185
    %v1494 = vpack.c.b16 %v1188, %v1187
    %v1495 = vpack.c.b16 %v1190, %v1189
    %v1496 = vpack.c.b16 %v1192, %v1191
    %v1497 = vpack.c.b16 %v1194, %v1193
    %v1498 = vpack.c.b16 %v1196, %v1195
    %v1499 = vpack.c.b16 %v1198, %v1197
    %v1500 = vpack.c.b16 %v1200, %v1199
    %v1501 = vpack.c.b16 %v1202, %v1201
    %v1502 = vpack.c.b16 %v1204, %v1203
    %v1503 = vpack.c.b16 %v1206, %v1205
    %v1504 = vpack.c.b16 %v1208, %v1207
    %v1505 = vpack.c.b16 %v1210, %v1209
    %v1506 = vpack.c.b16 %v1212, %v1211
    %v1507 = vpack.c.b16 %v1214, %v1213
    %v1508 = vpack.c.b16 %v1216, %v1215
    %v1509 = vpack.c.b16 %v1218, %v1217
    %v1510 = vpack.c.b16 %v1220, %v1219
    %v1511 = vpack.c.b16 %v1222, %v1221
    %v1512 = vpack.c.b16 %v1224, %v1223
    %v1513 = vpack.c.b16 %v1226, %v1225
    %v1514 = vpack.c.b16 %v1228, %v1227
    %v1515 = vpack.c.b16 %v1230, %v1229
    %v1516 = vpack.c.b16 %v1232, %v1231
    %v1517 = vpack.c.b16 %v1234, %v1233
    %v1518 = vpack.c.b16 %v1236, %v1235
    %v1519 = vpack.c.b16 %v1238, %v1237
    %v1520 = vpack.c.b16 %v1240, %v1239
    %v1521 = vpack.c.b16 %v1242, %v1241
    %v1522 = vpack.c.b16 %v1244, %v1243
    %v1523 = vpack.c.b16 %v1246, %v1245
    %v1524 = vpack.c.b16 %v1248, %v1247
    %v1525 = vpack.c.b16 %v1250, %v1249
    %v1526 = vpack.c.b16 %v1252, %v1251
    %v1527 = vpack.c.b16 %v1254, %v1253
    %v1528 = vpack.c.b16 %v1256, %v1255
    %v1529 = vpack.c.b16 %v1258, %v1257
    %v1530 = vpack.c.b16 %v1260, %v1259
    %v1531 = vpack.c.b16 %v1262, %v1261
    %v1532 = vpack.c.b16 %v1264, %v1263
    %v1533 = vpack.c.b16 %v1266, %v1265
    %v1534 = vpack.c.b16 %v1268, %v1267
    %v1535 = vpack.c.b16 %v1270, %v1269
    %v1536 = vpack.c.b16 %v1272, %v1271
    %v1537 = vpack.c.b16 %v1274, %v1273
    %v1538 = vpack.c.b16 %v1276, %v1275
    %v1539 = vpack.c.b16 %v1278, %v1277
    %v1540 = vpack.c.b16 %v1280, %v1279
    %v1541 = vpack.c.b16 %v1282, %v1281
    %v1542 = vpack.c.b16 %v1284, %v1283
    %v1543 = vpack.c.b16 %v1286, %v1285
    %v1544 = vpack.c.b16 %v1288, %v1287
    %v1545 = vpack.c.b16 %v1290, %v1289
    %v1546 = vpack.c.b16 %v1292, %v1291
    %v1547 = vpack.c.b16 %v1294, %v1293
    %v1548 = vpack.c.b16 %v1296, %v1295
    %v1549 = vpack.c.b16 %v1298, %v1297
    %v1550 = vpack.c.b16 %v1300, %v1299
    %v1551 = vpack.c.b16 %v1302, %v1301
    %v1552 = vpack.c.b16 %v1304, %v1303
    %v1553 = vpack.c.b16 %v1306, %v1305
    %v1554 = vpack.c.b16 %v1308, %v1307
    %v1555 = vpack.c.b16 %v1310, %v1309
    %v1556 = vpack.c.b16 %v1312, %v1311
    %v1557 = vpack.c.b16 %v1314, %v1313
    %v1558 = vpack.c.b16 %v1316, %v1315
    %v1559 = vpack.c.b16 %v1318, %v1317
    %v1560 = vpack.c.b16 %v1320, %v1319
    %v1561 = vpack.c.b16 %v1322, %v1321
    %v1562 = vpack.c.b16 %v1324, %v1323
    %v1563 = vpack.c.b16 %v1326, %v1325
    %v1564 = vpack.c.b16 %v1328, %v1327
    %v1565 = vpack.c.b16 %v1330, %v1329
    %v1566 = vpack.c.b16 %v1332, %v1331
    %v1567 = vpack.c.b16 %v1334, %v1333
    %v1568 = vpack.c.b16 %v1336, %v1335
    %v1569 = vpack.c.b16 %v1338, %v1337
    %v1570 = vpack.c.b16 %v1340, %v1339
    %v1571 = vpack.c.b16 %v1342, %v1341
    %v1572 = vpack.c.b16 %v1344, %v1343
    %v1573 = vpack.c.b16 %v1346, %v1345
    %v1574 = vpack.c.b16 %v1348, %v1347
    %v1575 = vpack.c.b16 %v1350, %v1349
    %v1576 = vpack.c.b16 %v1352, %v1351
    %v1577 = vpack.c.b16 %v1354, %v1353
    %v1578 = vpack.c.b16 %v1356, %v1355
    %v1579 = vpack.c.b16 %v1358, %v1357
    %v1580 = vpack.c.b16 %v1360, %v1359
    %v1581 = vpack.c.b16 %v1362, %v1361
    %v1582 = vpack.c.b16 %v1364, %v1363
    %v1583 = vpack.c.b16 %v1366, %v1365
    %v1584 = vpack.c.b16 %v1368, %v1367
    %v1585 = vpack.c.b16 %v1370, %v1369
    %v1586 = vpack.c.b16 %v1372, %v1371
    %v1587 = vpack.c.b16 %v1374, %v1373
    %v1588 = vpack.c.b16 %v1376, %v1375
    %v1589 = vpack.c.b16 %v1378, %v1377
    %v1590 = vpack.c.b16 %v1380, %v1379
    %v1591 = vpack.c.b16 %v1382, %v1381
    %v1592 = vpack.c.b16 %v1384, %v1383
    %v1593 = vpack.c.b16 %v1386, %v1385
    %v1594 = vpack.c.b16 %v1388, %v1387
    %v1595 = vpack.c.b16 %v1390, %v1389
    %v1596 = vpack.c.b16 %v1392, %v1391
    %v1597 = vpack.c.b16 %v1394, %v1393
    %v1598 = vpack.c.b16 %v1396, %v1395
    %v1599 = vpack.c.b16 %v1398, %v1397
    %v1600 = vpack.c.b16 %v1400, %v1399
    %v1601 = vpack.c.b16 %v1402, %v1401
    %v1602 = vpack.c.b16 %v1404, %v1403
    %v1603 = vpack.c.b16 %v1406, %v1405
    %v1604 = vpack.c.b16 %v1408, %v1407
    %v1605 = vpack.c.b16 %v1410, %v1409
    %v1606 = vpack.c.b16 %v1412, %v1411
    %v1607 = vpack.c.b16 %v1414, %v1413
    %v1608 = vpack.c.b16 %v1416, %v1415
    %1801 = vmatprep.subr.bf16.mxu0 0
    %1802 = vmatpush1.bf16.msra.mxu0 %v1417
    %1803 = vmatprep.subr.bf16.mxu0 0
    %1804 = vmatpush1.bf16.msra.mxu0 %v1418
    %1805 = vmatprep.subr.bf16.mxu0 0
    %1806 = vmatpush1.bf16.msra.mxu0 %v1419
    %1807 = vmatprep.subr.bf16.mxu0 0
    %1808 = vmatpush1.bf16.msra.mxu0 %v1420
    %1809 = vmatprep.subr.bf16.mxu0 0
    %1810 = vmatpush1.bf16.msra.mxu0 %v1421
    %1811 = vmatprep.subr.bf16.mxu0 0
    %1812 = vmatpush1.bf16.msra.mxu0 %v1422
    %1813 = vmatprep.subr.bf16.mxu0 0
    %1814 = vmatpush1.bf16.msra.mxu0 %v1423
    %1815 = vmatprep.subr.bf16.mxu0 0
    %1816 = vmatpush1.bf16.msra.mxu0 %v1424
    %1817 = vmatprep.subr.bf16.mxu0 0
    %1818 = vmatpush1.bf16.msra.mxu0 %v1425
    %1819 = vmatprep.subr.bf16.mxu0 0
    %1820 = vmatpush1.bf16.msra.mxu0 %v1426
    %1821 = vmatprep.subr.bf16.mxu0 0
    %1822 = vmatpush1.bf16.msra.mxu0 %v1427
    %1823 = vmatprep.subr.bf16.mxu0 0
    %1824 = vmatpush1.bf16.msra.mxu0 %v1428
    %1825 = vmatprep.subr.bf16.mxu0 0
    %1826 = vmatpush1.bf16.msra.mxu0 %v1429
    %1827 = vmatprep.subr.bf16.mxu0 0
    %1828 = vmatpush1.bf16.msra.mxu0 %v1430
    %1829 = vmatprep.subr.bf16.mxu0 0
    %1830 = vmatpush1.bf16.msra.mxu0 %v1431
    %1831 = vmatprep.subr.bf16.mxu0 0
    %1832 = vmatpush1.bf16.msra.mxu0 %v1432
    %1833 = vmatprep.mubr.bf16.mxu0 %v515
    %1834 = vmatmul.mubr.bf16.gmra.mrb[0].mxu0 %v501
    %v1835 = vpop.f32.mrb[0].mxu0
    %v1836 = vadd.f32 %v473, %v1835
    %v1837 = vpop.f32.mrb[0].mxu0
    %v1838 = vpop.f32.mrb[0].mxu0
    %v1839 = vpop.f32.mrb[0].mxu0
    %1840 = vdwg.mxu0
    %1841 = vmatprep.subr.bf16.mxu0 0
    %1842 = vmatpush1.bf16.msra.mxu0 %v1433
    %1843 = vmatprep.subr.bf16.mxu0 0
    %1844 = vmatpush1.bf16.msra.mxu0 %v1434
    %1845 = vmatprep.subr.bf16.mxu0 0
    %1846 = vmatpush1.bf16.msra.mxu0 %v1435
    %1847 = vmatprep.subr.bf16.mxu0 0
    %1848 = vmatpush1.bf16.msra.mxu0 %v1436
    %1849 = vmatprep.subr.bf16.mxu0 0
    %1850 = vmatpush1.bf16.msra.mxu0 %v1437
    %1851 = vmatprep.subr.bf16.mxu0 0
    %1852 = vmatpush1.bf16.msra.mxu0 %v1438
    %1853 = vmatprep.subr.bf16.mxu0 0
    %1854 = vmatpush1.bf16.msra.mxu0 %v1439
    %1855 = vmatprep.subr.bf16.mxu0 0
    %1856 = vmatpush1.bf16.msra.mxu0 %v1440
    %1857 = vmatprep.subr.bf16.mxu0 0
    %1858 = vmatpush1.bf16.msra.mxu0 %v1441
    %1859 = vmatprep.subr.bf16.mxu0 0
    %1860 = vmatpush1.bf16.msra.mxu0 %v1442
    %1861 = vmatprep.subr.bf16.mxu0 0
    %1862 = vmatpush1.bf16.msra.mxu0 %v1443
    %1863 = vmatprep.subr.bf16.mxu0 0
    %1864 = vmatpush1.bf16.msra.mxu0 %v1444
    %1865 = vmatprep.subr.bf16.mxu0 0
    %1866 = vmatpush1.bf16.msra.mxu0 %v1445
    %1867 = vmatprep.subr.bf16.mxu0 0
    %1868 = vmatpush1.bf16.msra.mxu0 %v1446
    %1869 = vmatprep.subr.bf16.mxu0 0
    %1870 = vmatpush1.bf16.msra.mxu0 %v1447
    %1871 = vmatprep.subr.bf16.mxu0 0
    %1872 = vmatpush1.bf16.msra.mxu0 %v1448
    %1873 = vmatprep.mubr.bf16.mxu0 %v525
    %1874 = vmatmul.mubr.bf16.gmra.mrb[0].mxu0 %v523
    %v1875 = vpop.f32.mrb[0].mxu0
    %v1876 = vadd.f32 %v1836, %v1875
    %v1877 = vpop.f32.mrb[0].mxu0
    %v1878 = vpop.f32.mrb[0].mxu0
    %v1879 = vpop.f32.mrb[0].mxu0
    %1880 = vdwg.mxu0
    %1881 = vmatprep.subr.bf16.mxu0 0
    %1882 = vmatpush1.bf16.msra.mxu0 %v1449
    %1883 = vmatprep.subr.bf16.mxu0 0
    %1884 = vmatpush1.bf16.msra.mxu0 %v1450
    %1885 = vmatprep.subr.bf16.mxu0 0
    %1886 = vmatpush1.bf16.msra.mxu0 %v1451
    %1887 = vmatprep.subr.bf16.mxu0 0
    %1888 = vmatpush1.bf16.msra.mxu0 %v1452
    %1889 = vmatprep.subr.bf16.mxu0 0
    %1890 = vmatpush1.bf16.msra.mxu0 %v1453
    %1891 = vmatprep.subr.bf16.mxu0 0
    %1892 = vmatpush1.bf16.msra.mxu0 %v1454
    %1893 = vmatprep.subr.bf16.mxu0 0
    %1894 = vmatpush1.bf16.msra.mxu0 %v1455
    %1895 = vmatprep.subr.bf16.mxu0 0
    %1896 = vmatpush1.bf16.msra.mxu0 %v1456
    %1897 = vmatprep.subr.bf16.mxu0 0
    %1898 = vmatpush1.bf16.msra.mxu0 %v1457
    %1899 = vmatprep.subr.bf16.mxu0 0
    %1900 = vmatpush1.bf16.msra.mxu0 %v1458
    %1901 = vmatprep.subr.bf16.mxu0 0
    %1902 = vmatpush1.bf16.msra.mxu0 %v1459
    %1903 = vmatprep.subr.bf16.mxu0 0
    %1904 = vmatpush1.bf16.msra.mxu0 %v1460
    %1905 = vmatprep.subr.bf16.mxu0 0
    %1906 = vmatpush1.bf16.msra.mxu0 %v1461
    %1907 = vmatprep.subr.bf16.mxu0 0
    %1908 = vmatpush1.bf16.msra.mxu0 %v1462
    %1909 = vmatprep.subr.bf16.mxu0 0
    %1910 = vmatpush1.bf16.msra.mxu0 %v1463
    %1911 = vmatprep.subr.bf16.mxu0 0
    %1912 = vmatpush1.bf16.msra.mxu0 %v1464
    %1913 = vmatprep.mubr.bf16.mxu0 %v522
    %1914 = vmatmul.mubr.bf16.gmra.mrb[0].mxu0 %v508
    %v1915 = vpop.f32.mrb[0].mxu0
    %v1916 = vadd.f32 %v1876, %v1915
    %v1917 = vpop.f32.mrb[0].mxu0
    %v1918 = vpop.f32.mrb[0].mxu0
    %v1919 = vpop.f32.mrb[0].mxu0
    %1920 = vdwg.mxu0
    %1921 = vmatprep.subr.bf16.mxu0 0
    %1922 = vmatpush1.bf16.msra.mxu0 %v1465
    %1923 = vmatprep.subr.bf16.mxu0 0
    %1924 = vmatpush1.bf16.msra.mxu0 %v1466
    %1925 = vmatprep.subr.bf16.mxu0 0
    %1926 = vmatpush1.bf16.msra.mxu0 %v1467
    %1927 = vmatprep.subr.bf16.mxu0 0
    %1928 = vmatpush1.bf16.msra.mxu0 %v1468
    %1929 = vmatprep.subr.bf16.mxu0 0
    %1930 = vmatpush1.bf16.msra.mxu0 %v1469
    %1931 = vmatprep.subr.bf16.mxu0 0
    %1932 = vmatpush1.bf16.msra.mxu0 %v1470
    %1933 = vmatprep.subr.bf16.mxu0 0
    %1934 = vmatpush1.bf16.msra.mxu0 %v1471
    %1935 = vmatprep.subr.bf16.mxu0 0
    %1936 = vmatpush1.bf16.msra.mxu0 %v1472
    %1937 = vmatprep.subr.bf16.mxu0 0
    %1938 = vmatpush1.bf16.msra.mxu0 %v1473
    %1939 = vmatprep.subr.bf16.mxu0 0
    %1940 = vmatpush1.bf16.msra.mxu0 %v1474
    %1941 = vmatprep.subr.bf16.mxu0 0
    %1942 = vmatpush1.bf16.msra.mxu0 %v1475
    %1943 = vmatprep.subr.bf16.mxu0 0
    %1944 = vmatpush1.bf16.msra.mxu0 %v1476
    %1945 = vmatprep.subr.bf16.mxu0 0
    %1946 = vmatpush1.bf16.msra.mxu0 %v1477
    %1947 = vmatprep.subr.bf16.mxu0 0
    %1948 = vmatpush1.bf16.msra.mxu0 %v1478
    %1949 = vmatprep.subr.bf16.mxu0 0
    %1950 = vmatpush1.bf16.msra.mxu0 %v1479
    %1951 = vmatprep.subr.bf16.mxu0 0
    %1952 = vmatpush1.bf16.msra.mxu0 %v1480
    %1953 = vmatprep.mubr.bf16.mxu0 %v526
    %1954 = vmatmul.mubr.bf16.gmra.mrb[0].mxu0 %v524
    %v1955 = vpop.f32.mrb[0].mxu0
    %v1956 = vadd.f32 %v1916, %v1955
    %v1957 = vpop.f32.mrb[0].mxu0
    %v1958 = vpop.f32.mrb[0].mxu0
    %v1959 = vpop.f32.mrb[0].mxu0
    %1960 = vdwg.mxu0
    %1961 = vmatprep.subr.bf16.mxu0 0
    %1962 = vmatpush1.bf16.msra.mxu0 %v1481
    %1963 = vmatprep.subr.bf16.mxu0 0
    %1964 = vmatpush1.bf16.msra.mxu0 %v1482
    %1965 = vmatprep.subr.bf16.mxu0 0
    %1966 = vmatpush1.bf16.msra.mxu0 %v1483
    %1967 = vmatprep.subr.bf16.mxu0 0
    %1968 = vmatpush1.bf16.msra.mxu0 %v1484
    %1969 = vmatprep.subr.bf16.mxu0 0
    %1970 = vmatpush1.bf16.msra.mxu0 %v1485
    %1971 = vmatprep.subr.bf16.mxu0 0
    %1972 = vmatpush1.bf16.msra.mxu0 %v1486
    %1973 = vmatprep.subr.bf16.mxu0 0
    %1974 = vmatpush1.bf16.msra.mxu0 %v1487
    %1975 = vmatprep.subr.bf16.mxu0 0
    %1976 = vmatpush1.bf16.msra.mxu0 %v1488
    %1977 = vmatprep.subr.bf16.mxu0 0
    %1978 = vmatpush1.bf16.msra.mxu0 %v1489
    %1979 = vmatprep.subr.bf16.mxu0 0
    %1980 = vmatpush1.bf16.msra.mxu0 %v1490
    %1981 = vmatprep.subr.bf16.mxu0 0
    %1982 = vmatpush1.bf16.msra.mxu0 %v1491
    %1983 = vmatprep.subr.bf16.mxu0 0
    %1984 = vmatpush1.bf16.msra.mxu0 %v1492
    %1985 = vmatprep.subr.bf16.mxu0 0
    %1986 = vmatpush1.bf16.msra.mxu0 %v1493
    %1987 = vmatprep.subr.bf16.mxu0 0
    %1988 = vmatpush1.bf16.msra.mxu0 %v1494
    %1989 = vmatprep.subr.bf16.mxu0 0
    %1990 = vmatpush1.bf16.msra.mxu0 %v1495
    %1991 = vmatprep.subr.bf16.mxu0 0
    %1992 = vmatpush1.bf16.msra.mxu0 %v1496
    %1993 = vmatprep.mubr.bf16.mxu0 %v564
    %1994 = vmatmul.mubr.bf16.gmra.mrb[0].mxu0 %v550
    %v1995 = vpop.f32.mrb[0].mxu0
    %v1996 = vadd.f32 %v1956, %v1995
    %v1997 = vpop.f32.mrb[0].mxu0
    %v1998 = vpop.f32.mrb[0].mxu0
    %v1999 = vpop.f32.mrb[0].mxu0
    %2000 = vdwg.mxu0
    %2001 = vmatprep.subr.bf16.mxu0 0
    %2002 = vmatpush1.bf16.msra.mxu0 %v1497
    %2003 = vmatprep.subr.bf16.mxu0 0
    %2004 = vmatpush1.bf16.msra.mxu0 %v1498
    %2005 = vmatprep.subr.bf16.mxu0 0
    %2006 = vmatpush1.bf16.msra.mxu0 %v1499
    %2007 = vmatprep.subr.bf16.mxu0 0
    %2008 = vmatpush1.bf16.msra.mxu0 %v1500
    %2009 = vmatprep.subr.bf16.mxu0 0
    %2010 = vmatpush1.bf16.msra.mxu0 %v1501
    %2011 = vmatprep.subr.bf16.mxu0 0
    %2012 = vmatpush1.bf16.msra.mxu0 %v1502
    %2013 = vmatprep.subr.bf16.mxu0 0
    %2014 = vmatpush1.bf16.msra.mxu0 %v1503
    %2015 = vmatprep.subr.bf16.mxu0 0
    %2016 = vmatpush1.bf16.msra.mxu0 %v1504
    %2017 = vmatprep.subr.bf16.mxu0 0
    %2018 = vmatpush1.bf16.msra.mxu0 %v1505
    %2019 = vmatprep.subr.bf16.mxu0 0
    %2020 = vmatpush1.bf16.msra.mxu0 %v1506
    %2021 = vmatprep.subr.bf16.mxu0 0
    %2022 = vmatpush1.bf16.msra.mxu0 %v1507
    %2023 = vmatprep.subr.bf16.mxu0 0
    %2024 = vmatpush1.bf16.msra.mxu0 %v1508
    %2025 = vmatprep.subr.bf16.mxu0 0
    %2026 = vmatpush1.bf16.msra.mxu0 %v1509
    %2027 = vmatprep.subr.bf16.mxu0 0
    %2028 = vmatpush1.bf16.msra.mxu0 %v1510
    %2029 = vmatprep.subr.bf16.mxu0 0
    %2030 = vmatpush1.bf16.msra.mxu0 %v1511
    %2031 = vmatprep.subr.bf16.mxu0 0
    %2032 = vmatpush1.bf16.msra.mxu0 %v1512
    %2033 = vmatprep.mubr.bf16.mxu0 %v574
    %2034 = vmatmul.mubr.bf16.gmra.mrb[0].mxu0 %v572
    %v2035 = vpop.f32.mrb[0].mxu0
    %v2036 = vadd.f32 %v1996, %v2035
    %v2037 = vpop.f32.mrb[0].mxu0
    %v2038 = vpop.f32.mrb[0].mxu0
    %v2039 = vpop.f32.mrb[0].mxu0
    %2040 = vdwg.mxu0
    %2041 = vmatprep.subr.bf16.mxu0 0
    %2042 = vmatpush1.bf16.msra.mxu0 %v1513
    %2043 = vmatprep.subr.bf16.mxu0 0
    %2044 = vmatpush1.bf16.msra.mxu0 %v1514
    %2045 = vmatprep.subr.bf16.mxu0 0
    %2046 = vmatpush1.bf16.msra.mxu0 %v1515
    %2047 = vmatprep.subr.bf16.mxu0 0
    %2048 = vmatpush1.bf16.msra.mxu0 %v1516
    %2049 = vmatprep.subr.bf16.mxu0 0
    %2050 = vmatpush1.bf16.msra.mxu0 %v1517
    %2051 = vmatprep.subr.bf16.mxu0 0
    %2052 = vmatpush1.bf16.msra.mxu0 %v1518
    %2053 = vmatprep.subr.bf16.mxu0 0
    %2054 = vmatpush1.bf16.msra.mxu0 %v1519
    %2055 = vmatprep.subr.bf16.mxu0 0
    %2056 = vmatpush1.bf16.msra.mxu0 %v1520
    %2057 = vmatprep.subr.bf16.mxu0 0
    %2058 = vmatpush1.bf16.msra.mxu0 %v1521
    %2059 = vmatprep.subr.bf16.mxu0 0
    %2060 = vmatpush1.bf16.msra.mxu0 %v1522
    %2061 = vmatprep.subr.bf16.mxu0 0
    %2062 = vmatpush1.bf16.msra.mxu0 %v1523
    %2063 = vmatprep.subr.bf16.mxu0 0
    %2064 = vmatpush1.bf16.msra.mxu0 %v1524
    %2065 = vmatprep.subr.bf16.mxu0 0
    %2066 = vmatpush1.bf16.msra.mxu0 %v1525
    %2067 = vmatprep.subr.bf16.mxu0 0
    %2068 = vmatpush1.bf16.msra.mxu0 %v1526
    %2069 = vmatprep.subr.bf16.mxu0 0
    %2070 = vmatpush1.bf16.msra.mxu0 %v1527
    %2071 = vmatprep.subr.bf16.mxu0 0
    %2072 = vmatpush1.bf16.msra.mxu0 %v1528
    %2073 = vmatprep.mubr.bf16.mxu0 %v571
    %2074 = vmatmul.mubr.bf16.gmra.mrb[0].mxu0 %v557
    %v2075 = vpop.f32.mrb[0].mxu0
    %v2076 = vadd.f32 %v2036, %v2075
    %v2077 = vpop.f32.mrb[0].mxu0
    %v2078 = vpop.f32.mrb[0].mxu0
    %v2079 = vpop.f32.mrb[0].mxu0
    %2080 = vdwg.mxu0
    %2081 = vmatprep.subr.bf16.mxu0 0
    %2082 = vmatpush1.bf16.msra.mxu0 %v1529
    %2083 = vmatprep.subr.bf16.mxu0 0
    %2084 = vmatpush1.bf16.msra.mxu0 %v1530
    %2085 = vmatprep.subr.bf16.mxu0 0
    %2086 = vmatpush1.bf16.msra.mxu0 %v1531
    %2087 = vmatprep.subr.bf16.mxu0 0
    %2088 = vmatpush1.bf16.msra.mxu0 %v1532
    %2089 = vmatprep.subr.bf16.mxu0 0
    %2090 = vmatpush1.bf16.msra.mxu0 %v1533
    %2091 = vmatprep.subr.bf16.mxu0 0
    %2092 = vmatpush1.bf16.msra.mxu0 %v1534
    %2093 = vmatprep.subr.bf16.mxu0 0
    %2094 = vmatpush1.bf16.msra.mxu0 %v1535
    %2095 = vmatprep.subr.bf16.mxu0 0
    %2096 = vmatpush1.bf16.msra.mxu0 %v1536
    %2097 = vmatprep.subr.bf16.mxu0 0
    %2098 = vmatpush1.bf16.msra.mxu0 %v1537
    %2099 = vmatprep.subr.bf16.mxu0 0
    %2100 = vmatpush1.bf16.msra.mxu0 %v1538
    %2101 = vmatprep.subr.bf16.mxu0 0
    %2102 = vmatpush1.bf16.msra.mxu0 %v1539
    %2103 = vmatprep.subr.bf16.mxu0 0
    %2104 = vmatpush1.bf16.msra.mxu0 %v1540
    %2105 = vmatprep.subr.bf16.mxu0 0
    %2106 = vmatpush1.bf16.msra.mxu0 %v1541
    %2107 = vmatprep.subr.bf16.mxu0 0
    %2108 = vmatpush1.bf16.msra.mxu0 %v1542
    %2109 = vmatprep.subr.bf16.mxu0 0
    %2110 = vmatpush1.bf16.msra.mxu0 %v1543
    %2111 = vmatprep.subr.bf16.mxu0 0
    %2112 = vmatpush1.bf16.msra.mxu0 %v1544
    %2113 = vmatprep.mubr.bf16.mxu0 %v575
    %2114 = vmatmul.mubr.bf16.gmra.mrb[0].mxu0 %v573
    %v2115 = vpop.f32.mrb[0].mxu0
    %v2116 = vadd.f32 %v2076, %v2115
    %v2117 = vpop.f32.mrb[0].mxu0
    %v2118 = vpop.f32.mrb[0].mxu0
    %v2119 = vpop.f32.mrb[0].mxu0
    %2120 = vdwg.mxu0
    %2121 = vmatprep.subr.bf16.mxu0 0
    %2122 = vmatpush1.bf16.msra.mxu0 %v1545
    %2123 = vmatprep.subr.bf16.mxu0 0
    %2124 = vmatpush1.bf16.msra.mxu0 %v1546
    %2125 = vmatprep.subr.bf16.mxu0 0
    %2126 = vmatpush1.bf16.msra.mxu0 %v1547
    %2127 = vmatprep.subr.bf16.mxu0 0
    %2128 = vmatpush1.bf16.msra.mxu0 %v1548
    %2129 = vmatprep.subr.bf16.mxu0 0
    %2130 = vmatpush1.bf16.msra.mxu0 %v1549
    %2131 = vmatprep.subr.bf16.mxu0 0
    %2132 = vmatpush1.bf16.msra.mxu0 %v1550
    %2133 = vmatprep.subr.bf16.mxu0 0
    %2134 = vmatpush1.bf16.msra.mxu0 %v1551
    %2135 = vmatprep.subr.bf16.mxu0 0
    %2136 = vmatpush1.bf16.msra.mxu0 %v1552
    %2137 = vmatprep.subr.bf16.mxu0 0
    %2138 = vmatpush1.bf16.msra.mxu0 %v1553
    %2139 = vmatprep.subr.bf16.mxu0 0
    %2140 = vmatpush1.bf16.msra.mxu0 %v1554
    %2141 = vmatprep.subr.bf16.mxu0 0
    %2142 = vmatpush1.bf16.msra.mxu0 %v1555
    %2143 = vmatprep.subr.bf16.mxu0 0
    %2144 = vmatpush1.bf16.msra.mxu0 %v1556
    %2145 = vmatprep.subr.bf16.mxu0 0
    %2146 = vmatpush1.bf16.msra.mxu0 %v1557
    %2147 = vmatprep.subr.bf16.mxu0 0
    %2148 = vmatpush1.bf16.msra.mxu0 %v1558
    %2149 = vmatprep.subr.bf16.mxu0 0
    %2150 = vmatpush1.bf16.msra.mxu0 %v1559
    %2151 = vmatprep.subr.bf16.mxu0 0
    %2152 = vmatpush1.bf16.msra.mxu0 %v1560
    %2153 = vmatprep.mubr.bf16.mxu0 %v613
    %2154 = vmatmul.mubr.bf16.gmra.mrb[0].mxu0 %v599
    %v2155 = vpop.f32.mrb[0].mxu0
    %v2156 = vadd.f32 %v2116, %v2155
    %v2157 = vpop.f32.mrb[0].mxu0
    %v2158 = vpop.f32.mrb[0].mxu0
    %v2159 = vpop.f32.mrb[0].mxu0
    %2160 = vdwg.mxu0
    %2161 = vmatprep.subr.bf16.mxu0 0
    %2162 = vmatpush1.bf16.msra.mxu0 %v1561
    %2163 = vmatprep.subr.bf16.mxu0 0
    %2164 = vmatpush1.bf16.msra.mxu0 %v1562
    %2165 = vmatprep.subr.bf16.mxu0 0
    %2166 = vmatpush1.bf16.msra.mxu0 %v1563
    %2167 = vmatprep.subr.bf16.mxu0 0
    %2168 = vmatpush1.bf16.msra.mxu0 %v1564
    %2169 = vmatprep.subr.bf16.mxu0 0
    %2170 = vmatpush1.bf16.msra.mxu0 %v1565
    %2171 = vmatprep.subr.bf16.mxu0 0
    %2172 = vmatpush1.bf16.msra.mxu0 %v1566
    %2173 = vmatprep.subr.bf16.mxu0 0
    %2174 = vmatpush1.bf16.msra.mxu0 %v1567
    %2175 = vmatprep.subr.bf16.mxu0 0
    %2176 = vmatpush1.bf16.msra.mxu0 %v1568
    %2177 = vmatprep.subr.bf16.mxu0 0
    %2178 = vmatpush1.bf16.msra.mxu0 %v1569
    %2179 = vmatprep.subr.bf16.mxu0 0
    %2180 = vmatpush1.bf16.msra.mxu0 %v1570
    %2181 = vmatprep.subr.bf16.mxu0 0
    %2182 = vmatpush1.bf16.msra.mxu0 %v1571
    %2183 = vmatprep.subr.bf16.mxu0 0
    %2184 = vmatpush1.bf16.msra.mxu0 %v1572
    %2185 = vmatprep.subr.bf16.mxu0 0
    %2186 = vmatpush1.bf16.msra.mxu0 %v1573
    %2187 = vmatprep.subr.bf16.mxu0 0
    %2188 = vmatpush1.bf16.msra.mxu0 %v1574
    %2189 = vmatprep.subr.bf16.mxu0 0
    %2190 = vmatpush1.bf16.msra.mxu0 %v1575
    %2191 = vmatprep.subr.bf16.mxu0 0
    %2192 = vmatpush1.bf16.msra.mxu0 %v1576
    %2193 = vmatprep.mubr.bf16.mxu0 %v623
    %2194 = vmatmul.mubr.bf16.gmra.mrb[0].mxu0 %v621
    %v2195 = vpop.f32.mrb[0].mxu0
    %v2196 = vadd.f32 %v2156, %v2195
    %v2197 = vpop.f32.mrb[0].mxu0
    %v2198 = vpop.f32.mrb[0].mxu0
    %v2199 = vpop.f32.mrb[0].mxu0
    %2200 = vdwg.mxu0
    %2201 = vmatprep.subr.bf16.mxu0 0
    %2202 = vmatpush1.bf16.msra.mxu0 %v1577
    %2203 = vmatprep.subr.bf16.mxu0 0
    %2204 = vmatpush1.bf16.msra.mxu0 %v1578
    %2205 = vmatprep.subr.bf16.mxu0 0
    %2206 = vmatpush1.bf16.msra.mxu0 %v1579
    %2207 = vmatprep.subr.bf16.mxu0 0
    %2208 = vmatpush1.bf16.msra.mxu0 %v1580
    %2209 = vmatprep.subr.bf16.mxu0 0
    %2210 = vmatpush1.bf16.msra.mxu0 %v1581
    %2211 = vmatprep.subr.bf16.mxu0 0
    %2212 = vmatpush1.bf16.msra.mxu0 %v1582
    %2213 = vmatprep.subr.bf16.mxu0 0
    %2214 = vmatpush1.bf16.msra.mxu0 %v1583
    %2215 = vmatprep.subr.bf16.mxu0 0
    %2216 = vmatpush1.bf16.msra.mxu0 %v1584
    %2217 = vmatprep.subr.bf16.mxu0 0
    %2218 = vmatpush1.bf16.msra.mxu0 %v1585
    %2219 = vmatprep.subr.bf16.mxu0 0
    %2220 = vmatpush1.bf16.msra.mxu0 %v1586
    %2221 = vmatprep.subr.bf16.mxu0 0
    %2222 = vmatpush1.bf16.msra.mxu0 %v1587
    %2223 = vmatprep.subr.bf16.mxu0 0
    %2224 = vmatpush1.bf16.msra.mxu0 %v1588
    %2225 = vmatprep.subr.bf16.mxu0 0
    %2226 = vmatpush1.bf16.msra.mxu0 %v1589
    %2227 = vmatprep.subr.bf16.mxu0 0
    %2228 = vmatpush1.bf16.msra.mxu0 %v1590
    %2229 = vmatprep.subr.bf16.mxu0 0
    %2230 = vmatpush1.bf16.msra.mxu0 %v1591
    %2231 = vmatprep.subr.bf16.mxu0 0
    %2232 = vmatpush1.bf16.msra.mxu0 %v1592
    %2233 = vmatprep.mubr.bf16.mxu0 %v620
    %2234 = vmatmul.mubr.bf16.gmra.mrb[0].mxu0 %v606
    %v2235 = vpop.f32.mrb[0].mxu0
    %v2236 = vadd.f32 %v2196, %v2235
    %v2237 = vpop.f32.mrb[0].mxu0
    %v2238 = vpop.f32.mrb[0].mxu0
    %v2239 = vpop.f32.mrb[0].mxu0
    %2240 = vdwg.mxu0
    %2241 = vmatprep.subr.bf16.mxu0 0
    %2242 = vmatpush1.bf16.msra.mxu0 %v1593
    %2243 = vmatprep.subr.bf16.mxu0 0
    %2244 = vmatpush1.bf16.msra.mxu0 %v1594
    %2245 = vmatprep.subr.bf16.mxu0 0
    %2246 = vmatpush1.bf16.msra.mxu0 %v1595
    %2247 = vmatprep.subr.bf16.mxu0 0
    %2248 = vmatpush1.bf16.msra.mxu0 %v1596
    %2249 = vmatprep.subr.bf16.mxu0 0
    %2250 = vmatpush1.bf16.msra.mxu0 %v1597
    %2251 = vmatprep.subr.bf16.mxu0 0
    %2252 = vmatpush1.bf16.msra.mxu0 %v1598
    %2253 = vmatprep.subr.bf16.mxu0 0
    %2254 = vmatpush1.bf16.msra.mxu0 %v1599
    %2255 = vmatprep.subr.bf16.mxu0 0
    %2256 = vmatpush1.bf16.msra.mxu0 %v1600
    %2257 = vmatprep.subr.bf16.mxu0 0
    %2258 = vmatpush1.bf16.msra.mxu0 %v1601
    %2259 = vmatprep.subr.bf16.mxu0 0
    %2260 = vmatpush1.bf16.msra.mxu0 %v1602
    %2261 = vmatprep.subr.bf16.mxu0 0
    %2262 = vmatpush1.bf16.msra.mxu0 %v1603
    %2263 = vmatprep.subr.bf16.mxu0 0
    %2264 = vmatpush1.bf16.msra.mxu0 %v1604
    %2265 = vmatprep.subr.bf16.mxu0 0
    %2266 = vmatpush1.bf16.msra.mxu0 %v1605
    %2267 = vmatprep.subr.bf16.mxu0 0
    %2268 = vmatpush1.bf16.msra.mxu0 %v1606
    %2269 = vmatprep.subr.bf16.mxu0 0
    %2270 = vmatpush1.bf16.msra.mxu0 %v1607
    %2271 = vmatprep.subr.bf16.mxu0 0
    %2272 = vmatpush1.bf16.msra.mxu0 %v1608
    %2273 = vmatprep.mubr.bf16.mxu0 %v624
    %2274 = vmatmul.mubr.bf16.gmra.mrb[0].mxu0 %v622
    %v2275 = vpop.f32.mrb[0].mxu0
    %v2276 = vadd.f32 %v2236, %v2275
    %v2277 = vpop.f32.mrb[0].mxu0
    %v2278 = vpop.f32.mrb[0].mxu0
    %v2279 = vpop.f32.mrb[0].mxu0
    %2280 = vdwg.mxu0
    %v2281 = vmax.f32 %v2276, 0.0
    %v2282 = vpack.c.bf16 %v2281, %v2281
    %v2283 = vld [vmem:[#allocation7] sm:$0xf]
    %v2284 = vld [vmem:[#allocation7 + $0x4] sm:$0xf]
    %v2285 = vld [vmem:[#allocation7 + $0x8] sm:$0xf]
    %v2286 = vld [vmem:[#allocation7 + $0xc] sm:$0xf]
    %v2287 = vld [vmem:[#allocation7 + $0x10] sm:$0xf]
    %v2288 = vld [vmem:[#allocation7 + $0x14] sm:$0xf]
    %v2289 = vld [vmem:[#allocation7 + $0x18] sm:$0xf]
    %v2290 = vld [vmem:[#allocation7 + $0x1c] sm:$0xf]
    %v2291 = vld [vmem:[#allocation7 + $0x20] sm:$0xf]
    %v2292 = vld [vmem:[#allocation7 + $0x24] sm:$0xf]
    %v2293 = vld [vmem:[#allocation7 + $0x28] sm:$0xf]
    %v2294 = vld [vmem:[#allocation7 + $0x2c] sm:$0xf]
    %v2295 = vld [vmem:[#allocation7 + $0x30] sm:$0xf]
    %v2296 = vld [vmem:[#allocation7 + $0x34] sm:$0xf]
    %v2297 = vld [vmem:[#allocation7 + $0x38] sm:$0xf]
    %v2298 = vld [vmem:[#allocation7 + $0x3c] sm:$0xf]
    %v2299 = vld [vmem:[%s4] sm:$0x1]
    %v2301 = vlaneseq
    %v2302 = vshrl.u32 %v2301, 7
    %v2303 = vsub.s32 0, %v2302
    %v2304 = vrot.slane %v2299, %v2303
    %v2322 = vunpack.c.l.b16 %v2283
    %v2323 = vunpack.c.l.b16 %v2284
    %v2324 = vunpack.c.l.b16 %v2285
    %v2325 = vunpack.c.l.b16 %v2286
    %v2326 = vunpack.c.l.b16 %v2287
    %v2327 = vunpack.c.l.b16 %v2288
    %v2328 = vunpack.c.l.b16 %v2289
    %v2329 = vunpack.c.l.b16 %v2290
    %v2330 = vunpack.c.l.b16 %v2291
    %v2331 = vunpack.c.l.b16 %v2292
    %v2332 = vunpack.c.l.b16 %v2293
    %v2333 = vunpack.c.l.b16 %v2294
    %v2334 = vunpack.c.l.b16 %v2295
    %v2335 = vunpack.c.l.b16 %v2296
    %v2336 = vunpack.c.l.b16 %v2297
    %v2337 = vunpack.c.l.b16 %v2298
    %v2338 = vpack.c.b16 %v2323, %v2322
    %v2339 = vpack.c.b16 %v2325, %v2324
    %v2340 = vpack.c.b16 %v2327, %v2326
    %v2341 = vpack.c.b16 %v2329, %v2328
    %v2342 = vpack.c.b16 %v2331, %v2330
    %v2343 = vpack.c.b16 %v2333, %v2332
    %v2344 = vpack.c.b16 %v2335, %v2334
    %v2345 = vpack.c.b16 %v2337, %v2336
    %2354 = vmatprep.subr.bf16.mxu0 0
    %2355 = vmatpush1.bf16.msra.mxu0 %v2338
    %2356 = vmatprep.subr.bf16.mxu0 0
    %2357 = vmatpush1.bf16.msra.mxu0 %v2339
    %2358 = vmatprep.subr.bf16.mxu0 0
    %2359 = vmatpush1.bf16.msra.mxu0 %v2340
    %2360 = vmatprep.subr.bf16.mxu0 0
    %2361 = vmatpush1.bf16.msra.mxu0 %v2341
    %2362 = vmatprep.subr.bf16.mxu0 0
    %2363 = vmatpush1.bf16.msra.mxu0 %v2342
    %2364 = vmatprep.subr.bf16.mxu0 0
    %2365 = vmatpush1.bf16.msra.mxu0 %v2343
    %2366 = vmatprep.subr.bf16.mxu0 0
    %2367 = vmatpush1.bf16.msra.mxu0 %v2344
    %2368 = vmatprep.subr.bf16.mxu0 0
    %2369 = vmatpush1.bf16.msra.mxu0 %v2345
    %2370 = vmatprep.subr.bf16.mxu0 0
    %2371 = vmatpush1.bf16.msra.mxu0 0
    %2372 = vmatprep.subr.bf16.mxu0 0
    %2373 = vmatpush1.bf16.msra.mxu0 0
    %2374 = vmatprep.subr.bf16.mxu0 0
    %2375 = vmatpush1.bf16.msra.mxu0 0
    %2376 = vmatprep.subr.bf16.mxu0 0
    %2377 = vmatpush1.bf16.msra.mxu0 0
    %2378 = vmatprep.subr.bf16.mxu0 0
    %2379 = vmatpush1.bf16.msra.mxu0 0
    %2380 = vmatprep.subr.bf16.mxu0 0
    %2381 = vmatpush1.bf16.msra.mxu0 0
    %2382 = vmatprep.subr.bf16.mxu0 0
    %2383 = vmatpush1.bf16.msra.mxu0 0
    %2384 = vmatprep.subr.bf16.mxu0 0
    %2385 = vmatpush1.bf16.msra.mxu0 0
    %2386 = vmatprep.mubr.bf16.mxu0 0
    %2387 = vmatmul.mubr.bf16.gmra.mrb[0].mxu0 %v2282
    %v2388 = vpop.f32.mrb[0].mxu0
    %v2389 = vadd.f32 %v2304, %v2388
    %v2390 = vpop.f32.mrb[0].mxu0
    %v2391 = vpop.f32.mrb[0].mxu0
    %v2392 = vpop.f32.mrb[0].mxu0
    %2393 = vdwg.mxu0
    %v2394 = vmax.f32 %v2389, 0.0
    %v2395 = vpack.c.bf16 %v2394, %v2394
    %v2396 = vld [vmem:[#allocation8] sm:$0xf]
    %v2397 = vld [vmem:[#allocation8 + $0x4] sm:$0xf]
    %v2398 = vld [vmem:[#allocation8 + $0x8] sm:$0xf]
    %v2399 = vld [vmem:[#allocation8 + $0xc] sm:$0xf]
    %v2400 = vld [vmem:[#allocation8 + $0x10] sm:$0xf]
    %v2401 = vld [vmem:[#allocation8 + $0x14] sm:$0xf]
    %v2402 = vld [vmem:[#allocation8 + $0x18] sm:$0xf]
    %v2403 = vld [vmem:[#allocation8 + $0x1c] sm:$0xf]
    %v2404 = vld [vmem:[#allocation8 + $0x20] sm:$0xf]
    %v2405 = vld [vmem:[#allocation8 + $0x24] sm:$0xf]
    %v2406 = vld [vmem:[#allocation8 + $0x28] sm:$0xf]
    %v2407 = vld [vmem:[#allocation8 + $0x2c] sm:$0xf]
    %v2408 = vld [vmem:[#allocation8 + $0x30] sm:$0xf]
    %v2409 = vld [vmem:[#allocation8 + $0x34] sm:$0xf]
    %v2410 = vld [vmem:[#allocation8 + $0x38] sm:$0xf]
    %v2411 = vld [vmem:[#allocation8 + $0x3c] sm:$0xf]
    %v2412 = vld [vmem:[%s6] sm:$0x1]
    %v2414 = vlaneseq
    %v2415 = vshrl.u32 %v2414, 7
    %v2416 = vsub.s32 0, %v2415
    %v2417 = vrot.slane %v2412, %v2416
    %v2435 = vunpack.c.l.b16 %v2396
    %v2436 = vunpack.c.l.b16 %v2397
    %v2437 = vunpack.c.l.b16 %v2398
    %v2438 = vunpack.c.l.b16 %v2399
    %v2439 = vunpack.c.l.b16 %v2400
    %v2440 = vunpack.c.l.b16 %v2401
    %v2441 = vunpack.c.l.b16 %v2402
    %v2442 = vunpack.c.l.b16 %v2403
    %v2443 = vunpack.c.l.b16 %v2404
    %v2444 = vunpack.c.l.b16 %v2405
    %v2445 = vunpack.c.l.b16 %v2406
    %v2446 = vunpack.c.l.b16 %v2407
    %v2447 = vunpack.c.l.b16 %v2408
    %v2448 = vunpack.c.l.b16 %v2409
    %v2449 = vunpack.c.l.b16 %v2410
    %v2450 = vunpack.c.l.b16 %v2411
    %v2451 = vpack.c.b16 %v2436, %v2435
    %v2452 = vpack.c.b16 %v2438, %v2437
    %v2453 = vpack.c.b16 %v2440, %v2439
    %v2454 = vpack.c.b16 %v2442, %v2441
    %v2455 = vpack.c.b16 %v2444, %v2443
    %v2456 = vpack.c.b16 %v2446, %v2445
    %v2457 = vpack.c.b16 %v2448, %v2447
    %v2458 = vpack.c.b16 %v2450, %v2449
    %2467 = vmatprep.subr.bf16.mxu0 0
    %2468 = vmatpush1.bf16.msra.mxu0 %v2451
    %2469 = vmatprep.subr.bf16.mxu0 0
    %2470 = vmatpush1.bf16.msra.mxu0 %v2452
    %2471 = vmatprep.subr.bf16.mxu0 0
    %2472 = vmatpush1.bf16.msra.mxu0 %v2453
    %2473 = vmatprep.subr.bf16.mxu0 0
    %2474 = vmatpush1.bf16.msra.mxu0 %v2454
    %2475 = vmatprep.subr.bf16.mxu0 0
    %2476 = vmatpush1.bf16.msra.mxu0 %v2455
    %2477 = vmatprep.subr.bf16.mxu0 0
    %2478 = vmatpush1.bf16.msra.mxu0 %v2456
    %2479 = vmatprep.subr.bf16.mxu0 0
    %2480 = vmatpush1.bf16.msra.mxu0 %v2457
    %2481 = vmatprep.subr.bf16.mxu0 0
    %2482 = vmatpush1.bf16.msra.mxu0 %v2458
    %2483 = vmatprep.subr.bf16.mxu0 0
    %2484 = vmatpush1.bf16.msra.mxu0 0
    %2485 = vmatprep.subr.bf16.mxu0 0
    %2486 = vmatpush1.bf16.msra.mxu0 0
    %2487 = vmatprep.subr.bf16.mxu0 0
    %2488 = vmatpush1.bf16.msra.mxu0 0
    %2489 = vmatprep.subr.bf16.mxu0 0
    %2490 = vmatpush1.bf16.msra.mxu0 0
    %2491 = vmatprep.subr.bf16.mxu0 0
    %2492 = vmatpush1.bf16.msra.mxu0 0
    %2493 = vmatprep.subr.bf16.mxu0 0
    %2494 = vmatpush1.bf16.msra.mxu0 0
    %2495 = vmatprep.subr.bf16.mxu0 0
    %2496 = vmatpush1.bf16.msra.mxu0 0
    %2497 = vmatprep.subr.bf16.mxu0 0
    %2498 = vmatpush1.bf16.msra.mxu0 0
    %2499 = vmatprep.mubr.bf16.mxu0 0
    %2500 = vmatmul.mubr.bf16.gmra.mrb[0].mxu0 %v2395
    %v2501 = vpop.f32.mrb[0].mxu0
    %v2502 = vadd.f32 %v2417, %v2501
    %v2503 = vpop.f32.mrb[0].mxu0
    %v2504 = vpop.f32.mrb[0].mxu0
    %v2505 = vpop.f32.mrb[0].mxu0
    %2506 = vdwg.mxu0
    %2507 = vst [vmem:[#allocation10] sm:$0x3] %v2502
    // Predicated region
    $region46: #{tpu_custom_call.1} parent=1 // pred_check
      _
    $region47: #{tpu_custom_call.1} parent=1 // pred_check_branch
      %2509 = sbr.rel (0) target = $region49
    $region48: #{tpu_custom_call.1} parent=1 // pred_region
      %s2511 = ssub.s32 32, 32
      %2512 = vsyncadd [#allocation4], %s2511
      %s2514 = sshll.u32 [#allocation10], 4
      %s2515 = int_to_ptr.vmem [resolvable:$true] %s2514
      %2517 = dma.vmem_to_hbm [thread:$0]  %s2515, 32, %s7, [#allocation4]
    $region49: #{tpu_custom_call.1} parent=1 // pred_fallthru
      _
    // Predicated region
    $region50: #{tpu_custom_call.1} parent=1 // pred_check
      _
    $region51: #{tpu_custom_call.1} parent=1 // pred_check_branch
      %2519 = sbr.rel (0) target = $region53
    $region52: #{tpu_custom_call.1} parent=1 // pred_region
      %2520 = dma.done [#allocation4], 32
    $region53: #{tpu_custom_call.1} parent=1 // pred_fallthru
      _
    %2521 = vsyncpa [#allocation3], 1
    %2522 = vsyncpa [#allocation6], 1
    %2523 = vsyncpa [#allocation9], 1
    %2524 = vsyncpa [#allocation4], 1

</llo_original>
